<compile_context>
chip_gen: v5e
topology: v5e:2x2
jax: 0.10.0
libtpu: 0.0.40
codegen_flags: <defaults>
</compile_context>

<pallas_src>
import functools

import jax
import jax.numpy as jnp
from jax import lax
from jax.experimental import pallas as pl
from jax.experimental.pallas import tpu as pltpu

_LANE = 128
_SLOTS = 4   # row ring depth: 3 rows in use + 1 being prefetched (no overwrite race)
_DEAD = 8    # aligned sublane offset of the first data row; row _DEAD-1 is the d=-1 zero halo


def _dwconv3d_kernel(x_hbm, w_ref, b_ref, o_ref, ring, sem, *, H, W, D, Cp, CS, TW):
    """One grid step = one (batch, output H-row).

    x_hbm : (B, H, W, D, Cp) raw HBM ref (memory_space=ANY), manual row DMAs
    w_ref : (27, Cp) depthwise weights, row index = kh*9 + kw*3 + kd
    b_ref : (1, Cp)  bias
    o_ref : (1, 1, W, D, Cp) output row block
    ring  : (4, W+2, _DEAD+D+1, Cp) VMEM row ring (W halo at 0/W+1, D data at sublane
            offset _DEAD, zero halo rows at _DEAD-1 and _DEAD+D)
    sem   : (4,) DMA semaphores, one per ring slot
    """
    b = pl.program_id(0)
    h = pl.program_id(1)

    def row_copy(row, slot):
        return pltpu.make_async_copy(
            x_hbm.at[b, row],
            ring.at[slot, pl.ds(1, W), pl.ds(_DEAD, D), :],
            sem.at[slot],
        )

    # ---- Prime the ring at the first row of each batch element ----------------
    @pl.when(h == 0)
    def _prime():
        # Zero once per batch: halo cells (w=-1/W slabs, d=-1/D rows, dead prefix)
        # are never written by the row DMAs and must read as exact zeros.
        ring[...] = jnp.zeros_like(ring)
        row_copy(0, 0).start()
        if H > 1:
            row_copy(1, 1).start()

    # ---- Wait for the rows this step needs (each DMA is waited exactly once) --
    @pl.when(h == 0)
    def _wait_first():
        row_copy(0, 0).wait()

    @pl.when(h + 1 <= H - 1)
    def _wait_next():
        nxt = h + 1
        row_copy(nxt, nxt % _SLOTS).wait()

    # ---- Prefetch the row needed by the next step (slot not in use this step) -
    @pl.when(h + 2 <= H - 1)
    def _prefetch():
        nxt2 = h + 2
        row_copy(nxt2, nxt2 % _SLOTS).start()

    # ---- 27-tap depthwise accumulation ----------------------------------------
    # H boundary: clamp the slot index (so we read real, finite data) and zero the
    # corresponding kh weight group.
    m_lo = jnp.where(h > 0, 1.0, 0.0).astype(jnp.float32)
    m_hi = jnp.where(h < H - 1, 1.0, 0.0).astype(jnp.float32)
    kh_mask = (m_lo, None, m_hi)
    slots = (
        jnp.maximum(h - 1, 0) % _SLOTS,
        h % _SLOTS,
        jnp.minimum(h + 1, H - 1) % _SLOTS,
    )

    for cs0 in range(0, Cp, CS):                       # 128-lane channel strips
        # Hoisted per-strip weights (H mask folded in) and bias.
        w_taps = []
        for kh in range(3):
            taps_kw = []
            for kw in range(3):
                taps_kd = []
                for kd in range(3):
                    wv = w_ref[kh * 9 + kw * 3 + kd, pl.ds(cs0, CS)].astype(jnp.float32)
                    if kh != 1:
                        wv = wv * kh_mask[kh]
                    taps_kd.append(wv)
                taps_kw.append(taps_kd)
            w_taps.append(taps_kw)
        bias_v = b_ref[0, pl.ds(cs0, CS)].astype(jnp.float32)

        for c0 in range(0, W, TW):                     # static W chunks (+ remainder)
            tw = min(TW, W - c0)
            acc = None                                 # ~tw * ceil(D/8) vregs, stays resident
            for kh in range(3):
                # One load per (chunk, kh, strip); kd shifts hoisted out of kw loop.
                plane = ring[slots[kh], pl.ds(c0, tw + 2), :, pl.ds(cs0, CS)]
                for kd in range(3):
                    shifted = plane[:, _DEAD - 1 + kd:_DEAD - 1 + kd + D, :].astype(
                        jnp.float32)                   # (tw+2, D, CS)
                    for kw in range(3):
                        term = shifted[kw:kw + tw] * w_taps[kh][kw][kd]
                        acc = term if acc is None else acc + term
            o_ref[0, 0, pl.ds(c0, tw), :, pl.ds(cs0, CS)] = (
                acc + bias_v).astype(o_ref.dtype)


def dwconv(x, H, W, D, weight, bias):
    """DWConv forward.

    x      : (B, N, C) with N == H*W*D  (same token order as the PyTorch module)
    weight : (C, 1, 3, 3, 3)  depthwise Conv3d weight
    bias   : (C,)
    returns: (B, N, C)
    """
    B, N, C = x.shape
    assert N == H * W * D, "token count must equal H*W*D"

    Cp = ((C + _LANE - 1) // _LANE) * _LANE            # lane-dense channels
    x5 = x.reshape(B, H, W, D, C)                      # free (contiguous) reshape
    if Cp != C:
        # TODO(synk): masked tail-lane stores would remove this host copy too;
        # it is a no-op for the real dim=768.
        x5 = jnp.pad(x5, ((0, 0), (0, 0), (0, 0), (0, 0), (0, Cp - C)))

    w27 = weight.reshape(C, 27).T                      # (27, C): [kh*9 + kw*3 + kd, c]
    b2 = bias.reshape(1, C)
    if Cp != C:
        w27 = jnp.pad(w27, ((0, 0), (0, Cp - C)))
        b2 = jnp.pad(b2, ((0, 0), (0, Cp - C)))

    itemsize = jnp.dtype(x.dtype).itemsize
    E = _DEAD + D + 1                                  # dead prefix + data + trailing zero row
    CS = _LANE
    # Keep the f32 accumulator tile around ~4 vregs (<=16 KiB) so the whole 27-tap
    # chain stays register resident.
    TW = max(1, min(W, 4 // max(1, ((D + 7) // 8) * (CS // _LANE))))

    ring_bytes = _SLOTS * (W + 2) * E * Cp * itemsize
    out_block_bytes = W * D * Cp * itemsize
    vmem_limit = int(min(48 * 2 ** 20,
                         max(16 * 2 ** 20,
                             ring_bytes + 2 * out_block_bytes + (4 << 20))))

    cost = pl.CostEstimate(
        flops=2 * 27 * B * H * W * D * Cp,
        transcendentals=0,
        bytes_accessed=(2 * B * H * W * D * Cp * itemsize     # x read once + out write
                        + 27 * Cp * itemsize + Cp * itemsize),
    )

    kernel = functools.partial(_dwconv3d_kernel, H=H, W=W, D=D, Cp=Cp, CS=CS, TW=TW)

    out = pl.pallas_call(
        kernel,
        out_shape=jax.ShapeDtypeStruct((B, H, W, D, Cp), x.dtype),
        grid_spec=pltpu.PrefetchScalarGridSpec(
            num_scalar_prefetch=0,
            grid=(B, H),
            in_specs=[
                pl.BlockSpec(memory_space=pl.ANY),              # x stays in HBM; manual DMAs
                pl.BlockSpec((27, Cp), lambda b, h: (0, 0)),    # weights
                pl.BlockSpec((1, Cp), lambda b, h: (0, 0)),     # bias
            ],
            out_specs=pl.BlockSpec((1, 1, W, D, Cp), lambda b, h: (b, h, 0, 0, 0)),
            scratch_shapes=[
                pltpu.VMEM((_SLOTS, W + 2, E, Cp), x.dtype),    # row ring
                pltpu.SemaphoreType.DMA((_SLOTS,)),
            ],
        ),
        compiler_params=pltpu.CompilerParams(
            dimension_semantics=("parallel", "arbitrary"),      # B megacore-split; H carries ring
            vmem_limit_bytes=vmem_limit,
        ),
        cost_estimate=cost,
    )(x5, w27, b2)

    if Cp != C:
        out = out[..., :C]
    return out.reshape(B, N, C)


def _reference(x, H, W, D, weight, bias):
    # Pure-JAX reference: grouped (depthwise) 3D conv in NCHWD layout.
    B, N, C = x.shape
    x5 = jnp.transpose(x, (0, 2, 1)).reshape(B, C, H, W, D)
    y = lax.conv_general_dilated(
        x5, weight,
        window_strides=(1, 1, 1),
        padding=((1, 1), (1, 1), (1, 1)),
        dimension_numbers=("NCHWD", "OIHWD", "NCHWD"),
        feature_group_count=C,
        precision=lax.Precision.HIGHEST,
    ) + bias.reshape(1, C, 1, 1, 1)
    return jnp.transpose(y.reshape(B, C, N), (0, 2, 1))


if __name__ == "__main__":
    key = jax.random.PRNGKey(0)
    # Small shapes consistent with the module (dim=768 in the real model; 128 here
    # keeps the channel axis lane-aligned, D=8 keeps the sublane axis aligned,
    # W=6 exercises the remainder W-chunk, H=8 exercises both H boundaries).
    B, C, H, W, D = 2, 128, 8, 6, 8
    N = H * W * D
    kx, kw, kb = jax.random.split(key, 3)

    x = jax.random.normal(kx, (B, N, C), dtype=jnp.float32)
    # Shapes per nn.Conv3d(dim, dim, 3, 1, 1, bias=True, groups=dim)
    weight = jax.random.normal(kw, (C, 1, 3, 3, 3), dtype=jnp.float32) * 0.1
    bias = jax.random.normal(kb, (C,), dtype=jnp.float32) * 0.1

    out = jax.block_until_ready(dwconv(x, H, W, D, weight, bias))

    ref = _reference(x, H, W, D, weight, bias)
    assert out.shape == (B, N, C)
    assert jnp.allclose(out, ref, atol=1e-4, rtol=1e-4), "mismatch vs reference"

    print("KERNEL_OK")
</pallas_src>

<mosaic_0001>
module attributes {stable_mosaic.version = 11 : i64} {
  func.func @_dwconv3d_kernel(%arg0: i32, %arg1: i32, %arg2: memref<2x8x6x8x128xf32, #tpu.memory_space<any>>, %arg3: memref<27x128xf32, #tpu.memory_space<vmem>>, %arg4: memref<1x128xf32, #tpu.memory_space<vmem>>, %arg5: memref<1x1x6x8x128xf32, #tpu.memory_space<vmem>>, %arg6: memref<4x8x17x128xf32, #tpu.memory_space<vmem>>, %arg7: memref<4x!tpu.dma_semaphore, #tpu.memory_space<semaphore_mem>>) attributes {dimension_semantics = [#tpu.dimension_semantics<parallel>, #tpu.dimension_semantics<arbitrary>], iteration_bounds = array<i64: 2, 8>, scalar_prefetch = 0 : i64, scratch_operands = 2 : i64, tpu.core_type = #tpu.core_type<tc>, window_params = [{}, {pipeline_mode = #tpu.pipeline_mode<synchronous>, transform_indices = @transform_1, window_bounds = array<i64: 27, 128>}, {pipeline_mode = #tpu.pipeline_mode<synchronous>, transform_indices = @transform_2, window_bounds = array<i64: 1, 128>}, {transform_indices = @transform_3, window_bounds = array<i64: 1, 1, 6, 8, 128>}]} {
    %c0_i32 = arith.constant 0 : i32
    %0 = arith.cmpi eq, %arg1, %c0_i32 : i32
    %1 = arith.extui %0 : i1 to i32
    %c0_i32_0 = arith.constant 0 : i32
    %2 = arith.cmpi ne, %1, %c0_i32_0 : i32
    scf.if %2 {
      %cst_89 = arith.constant 0.000000e+00 : f32
      %460 = vector.broadcast %cst_89 : f32 to vector<4x8x17x128xf32>
      %c0_90 = arith.constant 0 : index
      %c0_91 = arith.constant 0 : index
      %c0_92 = arith.constant 0 : index
      %c0_93 = arith.constant 0 : index
      %461 = vector.load %arg6[%c0_90, %c0_91, %c0_92, %c0_93] : memref<4x8x17x128xf32, #tpu.memory_space<vmem>>, vector<4x8x17x128xf32>
      tpu.vector_store %arg6[%c0_90, %c0_91, %c0_92, %c0_93], %460 {strides = array<i32>} : memref<4x8x17x128xf32, #tpu.memory_space<vmem>>, vector<4x8x17x128xf32>,
      %c0_i32_94 = arith.constant 0 : i32
      %c0_i32_95 = arith.constant 0 : i32
      %c0_i32_96 = arith.constant 0 : i32
      %c0_i32_97 = arith.constant 0 : i32
      %c0_i32_98 = arith.constant 0 : i32
      %c0_i32_99 = arith.constant 0 : i32
      %462 = tpu.memref_slice %arg2[%arg0, %c0_i32_94, %c0_i32_97, %c0_i32_98, %c0_i32_99] : memref<2x8x6x8x128xf32, #tpu.memory_space<any>> -> memref<1x1x6x8x128xf32, #tpu.memory_space<any>>
      %463 = tpu.memref_squeeze %462 : memref<1x1x6x8x128xf32, #tpu.memory_space<any>> -> memref<6x8x128xf32, #tpu.memory_space<any>>
      %c1_i32_100 = arith.constant 1 : i32
      %c8_i32 = arith.constant 8 : i32
      %c0_i32_101 = arith.constant 0 : i32
      %464 = tpu.memref_slice %arg6[%c0_i32_95, %c1_i32_100, %c8_i32, %c0_i32_101] : memref<4x8x17x128xf32, #tpu.memory_space<vmem>> -> memref<1x6x8x128xf32, #tpu.memory_space<vmem>>
      %465 = tpu.memref_squeeze %464 : memref<1x6x8x128xf32, #tpu.memory_space<vmem>> -> memref<6x8x128xf32, #tpu.memory_space<vmem>>
      %466 = tpu.memref_slice %arg7[%c0_i32_96] : memref<4x!tpu.dma_semaphore, #tpu.memory_space<semaphore_mem>> -> memref<1x!tpu.dma_semaphore, #tpu.memory_space<semaphore_mem>>
      %467 = tpu.memref_squeeze %466 : memref<1x!tpu.dma_semaphore, #tpu.memory_space<semaphore_mem>> -> memref<!tpu.dma_semaphore, #tpu.memory_space<semaphore_mem>>
      tpu.enqueue_dma source(%463 : memref<6x8x128xf32, #tpu.memory_space<any>>) target(%465 : memref<6x8x128xf32, #tpu.memory_space<vmem>>) target_semaphore(%467 : memref<!tpu.dma_semaphore, #tpu.memory_space<semaphore_mem>>)
      %c1_i32_102 = arith.constant 1 : i32
      %c1_i32_103 = arith.constant 1 : i32
      %c1_i32_104 = arith.constant 1 : i32
      %c0_i32_105 = arith.constant 0 : i32
      %c0_i32_106 = arith.constant 0 : i32
      %c0_i32_107 = arith.constant 0 : i32
      %468 = tpu.memref_slice %arg2[%arg0, %c1_i32_102, %c0_i32_105, %c0_i32_106, %c0_i32_107] : memref<2x8x6x8x128xf32, #tpu.memory_space<any>> -> memref<1x1x6x8x128xf32, #tpu.memory_space<any>>
      %469 = tpu.memref_squeeze %468 : memref<1x1x6x8x128xf32, #tpu.memory_space<any>> -> memref<6x8x128xf32, #tpu.memory_space<any>>
      %c1_i32_108 = arith.constant 1 : i32
      %c8_i32_109 = arith.constant 8 : i32
      %c0_i32_110 = arith.constant 0 : i32
      %470 = tpu.memref_slice %arg6[%c1_i32_103, %c1_i32_108, %c8_i32_109, %c0_i32_110] : memref<4x8x17x128xf32, #tpu.memory_space<vmem>> -> memref<1x6x8x128xf32, #tpu.memory_space<vmem>>
      %471 = tpu.memref_squeeze %470 : memref<1x6x8x128xf32, #tpu.memory_space<vmem>> -> memref<6x8x128xf32, #tpu.memory_space<vmem>>
      %472 = tpu.memref_slice %arg7[%c1_i32_104] : memref<4x!tpu.dma_semaphore, #tpu.memory_space<semaphore_mem>> -> memref<1x!tpu.dma_semaphore, #tpu.memory_space<semaphore_mem>>
      %473 = tpu.memref_squeeze %472 : memref<1x!tpu.dma_semaphore, #tpu.memory_space<semaphore_mem>> -> memref<!tpu.dma_semaphore, #tpu.memory_space<semaphore_mem>>
      tpu.enqueue_dma source(%469 : memref<6x8x128xf32, #tpu.memory_space<any>>) target(%471 : memref<6x8x128xf32, #tpu.memory_space<vmem>>) target_semaphore(%473 : memref<!tpu.dma_semaphore, #tpu.memory_space<semaphore_mem>>)
    } else {
    }
    %c0_i32_1 = arith.constant 0 : i32
    %3 = arith.cmpi eq, %arg1, %c0_i32_1 : i32
    %4 = arith.extui %3 : i1 to i32
    %c0_i32_2 = arith.constant 0 : i32
    %5 = arith.cmpi ne, %4, %c0_i32_2 : i32
    scf.if %5 {
      %c0_i32_89 = arith.constant 0 : i32
      %c0_i32_90 = arith.constant 0 : i32
      %c0_i32_91 = arith.constant 0 : i32
      %c0_i32_92 = arith.constant 0 : i32
      %c0_i32_93 = arith.constant 0 : i32
      %c0_i32_94 = arith.constant 0 : i32
      %460 = tpu.memref_slice %arg2[%arg0, %c0_i32_89, %c0_i32_92, %c0_i32_93, %c0_i32_94] : memref<2x8x6x8x128xf32, #tpu.memory_space<any>> -> memref<1x1x6x8x128xf32, #tpu.memory_space<any>>
      %461 = tpu.memref_squeeze %460 : memref<1x1x6x8x128xf32, #tpu.memory_space<any>> -> memref<6x8x128xf32, #tpu.memory_space<any>>
      %c1_i32_95 = arith.constant 1 : i32
      %c8_i32 = arith.constant 8 : i32
      %c0_i32_96 = arith.constant 0 : i32
      %462 = tpu.memref_slice %arg6[%c0_i32_90, %c1_i32_95, %c8_i32, %c0_i32_96] : memref<4x8x17x128xf32, #tpu.memory_space<vmem>> -> memref<1x6x8x128xf32, #tpu.memory_space<vmem>>
      %463 = tpu.memref_squeeze %462 : memref<1x6x8x128xf32, #tpu.memory_space<vmem>> -> memref<6x8x128xf32, #tpu.memory_space<vmem>>
      %464 = tpu.memref_slice %arg7[%c0_i32_91] : memref<4x!tpu.dma_semaphore, #tpu.memory_space<semaphore_mem>> -> memref<1x!tpu.dma_semaphore, #tpu.memory_space<semaphore_mem>>
      %465 = tpu.memref_squeeze %464 : memref<1x!tpu.dma_semaphore, #tpu.memory_space<semaphore_mem>> -> memref<!tpu.dma_semaphore, #tpu.memory_space<semaphore_mem>>
      tpu.wait_dma2 semaphore(%465 : memref<!tpu.dma_semaphore, #tpu.memory_space<semaphore_mem>>) src(%461 : memref<6x8x128xf32, #tpu.memory_space<any>>) dst(%463 : memref<6x8x128xf32, #tpu.memory_space<vmem>>)
    } else {
    }
    %c1_i32 = arith.constant 1 : i32
    %6 = arith.addi %arg1, %c1_i32 : i32
    %c7_i32 = arith.constant 7 : i32
    %7 = arith.cmpi sle, %6, %c7_i32 : i32
    %8 = arith.extui %7 : i1 to i32
    %c0_i32_3 = arith.constant 0 : i32
    %9 = arith.cmpi ne, %8, %c0_i32_3 : i32
    scf.if %9 {
      %c1_i32_89 = arith.constant 1 : i32
      %460 = arith.addi %arg1, %c1_i32_89 : i32
      %c4_i32_90 = arith.constant 4 : i32
      %c0_i32_91 = arith.constant 0 : i32
      %461 = arith.cmpi eq, %c4_i32_90, %c0_i32_91 : i32
      %c1_i32_92 = arith.constant 1 : i32
      %462 = arith.select %461, %c1_i32_92, %c4_i32_90 : i32
      %463 = arith.remsi %460, %462 : i32
      %c0_i32_93 = arith.constant 0 : i32
      %464 = arith.cmpi ne, %463, %c0_i32_93 : i32
      %c0_i32_94 = arith.constant 0 : i32
      %465 = arith.cmpi slt, %463, %c0_i32_94 : i32
      %c0_i32_95 = arith.constant 0 : i32
      %466 = arith.cmpi slt, %462, %c0_i32_95 : i32
      %467 = arith.xori %465, %466 : i1
      %468 = arith.andi %467, %464 : i1
      %469 = arith.addi %463, %462 : i32
      %470 = arith.select %468, %469, %463 : i32
      %c0_i32_96 = arith.constant 0 : i32
      %c0_i32_97 = arith.constant 0 : i32
      %c0_i32_98 = arith.constant 0 : i32
      %471 = tpu.memref_slice %arg2[%arg0, %460, %c0_i32_96, %c0_i32_97, %c0_i32_98] : memref<2x8x6x8x128xf32, #tpu.memory_space<any>> -> memref<1x1x6x8x128xf32, #tpu.memory_space<any>>
      %472 = tpu.memref_squeeze %471 : memref<1x1x6x8x128xf32, #tpu.memory_space<any>> -> memref<6x8x128xf32, #tpu.memory_space<any>>
      %c1_i32_99 = arith.constant 1 : i32
      %c8_i32 = arith.constant 8 : i32
      %c0_i32_100 = arith.constant 0 : i32
      %473 = tpu.memref_slice %arg6[%470, %c1_i32_99, %c8_i32, %c0_i32_100] : memref<4x8x17x128xf32, #tpu.memory_space<vmem>> -> memref<1x6x8x128xf32, #tpu.memory_space<vmem>>
      %474 = tpu.memref_squeeze %473 : memref<1x6x8x128xf32, #tpu.memory_space<vmem>> -> memref<6x8x128xf32, #tpu.memory_space<vmem>>
      %475 = tpu.memref_slice %arg7[%470] : memref<4x!tpu.dma_semaphore, #tpu.memory_space<semaphore_mem>> -> memref<1x!tpu.dma_semaphore, #tpu.memory_space<semaphore_mem>>
      %476 = tpu.memref_squeeze %475 : memref<1x!tpu.dma_semaphore, #tpu.memory_space<semaphore_mem>> -> memref<!tpu.dma_semaphore, #tpu.memory_space<semaphore_mem>>
      tpu.wait_dma2 semaphore(%476 : memref<!tpu.dma_semaphore, #tpu.memory_space<semaphore_mem>>) src(%472 : memref<6x8x128xf32, #tpu.memory_space<any>>) dst(%474 : memref<6x8x128xf32, #tpu.memory_space<vmem>>)
    } else {
    }
    %c2_i32 = arith.constant 2 : i32
    %10 = arith.addi %arg1, %c2_i32 : i32
    %c7_i32_4 = arith.constant 7 : i32
    %11 = arith.cmpi sle, %10, %c7_i32_4 : i32
    %12 = arith.extui %11 : i1 to i32
    %c0_i32_5 = arith.constant 0 : i32
    %13 = arith.cmpi ne, %12, %c0_i32_5 : i32
    scf.if %13 {
      %c2_i32_89 = arith.constant 2 : i32
      %460 = arith.addi %arg1, %c2_i32_89 : i32
      %c4_i32_90 = arith.constant 4 : i32
      %c0_i32_91 = arith.constant 0 : i32
      %461 = arith.cmpi eq, %c4_i32_90, %c0_i32_91 : i32
      %c1_i32_92 = arith.constant 1 : i32
      %462 = arith.select %461, %c1_i32_92, %c4_i32_90 : i32
      %463 = arith.remsi %460, %462 : i32
      %c0_i32_93 = arith.constant 0 : i32
      %464 = arith.cmpi ne, %463, %c0_i32_93 : i32
      %c0_i32_94 = arith.constant 0 : i32
      %465 = arith.cmpi slt, %463, %c0_i32_94 : i32
      %c0_i32_95 = arith.constant 0 : i32
      %466 = arith.cmpi slt, %462, %c0_i32_95 : i32
      %467 = arith.xori %465, %466 : i1
      %468 = arith.andi %467, %464 : i1
      %469 = arith.addi %463, %462 : i32
      %470 = arith.select %468, %469, %463 : i32
      %c0_i32_96 = arith.constant 0 : i32
      %c0_i32_97 = arith.constant 0 : i32
      %c0_i32_98 = arith.constant 0 : i32
      %471 = tpu.memref_slice %arg2[%arg0, %460, %c0_i32_96, %c0_i32_97, %c0_i32_98] : memref<2x8x6x8x128xf32, #tpu.memory_space<any>> -> memref<1x1x6x8x128xf32, #tpu.memory_space<any>>
      %472 = tpu.memref_squeeze %471 : memref<1x1x6x8x128xf32, #tpu.memory_space<any>> -> memref<6x8x128xf32, #tpu.memory_space<any>>
      %c1_i32_99 = arith.constant 1 : i32
      %c8_i32 = arith.constant 8 : i32
      %c0_i32_100 = arith.constant 0 : i32
      %473 = tpu.memref_slice %arg6[%470, %c1_i32_99, %c8_i32, %c0_i32_100] : memref<4x8x17x128xf32, #tpu.memory_space<vmem>> -> memref<1x6x8x128xf32, #tpu.memory_space<vmem>>
      %474 = tpu.memref_squeeze %473 : memref<1x6x8x128xf32, #tpu.memory_space<vmem>> -> memref<6x8x128xf32, #tpu.memory_space<vmem>>
      %475 = tpu.memref_slice %arg7[%470] : memref<4x!tpu.dma_semaphore, #tpu.memory_space<semaphore_mem>> -> memref<1x!tpu.dma_semaphore, #tpu.memory_space<semaphore_mem>>
      %476 = tpu.memref_squeeze %475 : memref<1x!tpu.dma_semaphore, #tpu.memory_space<semaphore_mem>> -> memref<!tpu.dma_semaphore, #tpu.memory_space<semaphore_mem>>
      tpu.enqueue_dma source(%472 : memref<6x8x128xf32, #tpu.memory_space<any>>) target(%474 : memref<6x8x128xf32, #tpu.memory_space<vmem>>) target_semaphore(%476 : memref<!tpu.dma_semaphore, #tpu.memory_space<semaphore_mem>>)
    } else {
    }
    %c0_i32_6 = arith.constant 0 : i32
    %14 = arith.cmpi sgt, %arg1, %c0_i32_6 : i32
    %cst = arith.constant 1.000000e+00 : f32
    %cst_7 = arith.constant 0.000000e+00 : f32
    %15 = arith.select %14, %cst, %cst_7 : f32
    %c7_i32_8 = arith.constant 7 : i32
    %16 = arith.cmpi slt, %arg1, %c7_i32_8 : i32
    %cst_9 = arith.constant 1.000000e+00 : f32
    %cst_10 = arith.constant 0.000000e+00 : f32
    %17 = arith.select %16, %cst_9, %cst_10 : f32
    %c1_i32_11 = arith.constant 1 : i32
    %18 = arith.subi %arg1, %c1_i32_11 : i32
    %c0_i32_12 = arith.constant 0 : i32
    %19 = arith.maxsi %18, %c0_i32_12 : i32
    %c4_i32 = arith.constant 4 : i32
    %c0_i32_13 = arith.constant 0 : i32
    %20 = arith.cmpi eq, %c4_i32, %c0_i32_13 : i32
    %c1_i32_14 = arith.constant 1 : i32
    %21 = arith.select %20, %c1_i32_14, %c4_i32 : i32
    %22 = arith.remsi %19, %21 : i32
    %c0_i32_15 = arith.constant 0 : i32
    %23 = arith.cmpi ne, %22, %c0_i32_15 : i32
    %c0_i32_16 = arith.constant 0 : i32
    %24 = arith.cmpi slt, %22, %c0_i32_16 : i32
    %c0_i32_17 = arith.constant 0 : i32
    %25 = arith.cmpi slt, %21, %c0_i32_17 : i32
    %26 = arith.xori %24, %25 : i1
    %27 = arith.andi %26, %23 : i1
    %28 = arith.addi %22, %21 : i32
    %29 = arith.select %27, %28, %22 : i32
    %c4_i32_18 = arith.constant 4 : i32
    %c0_i32_19 = arith.constant 0 : i32
    %30 = arith.cmpi eq, %c4_i32_18, %c0_i32_19 : i32
    %c1_i32_20 = arith.constant 1 : i32
    %31 = arith.select %30, %c1_i32_20, %c4_i32_18 : i32
    %32 = arith.remsi %arg1, %31 : i32
    %c0_i32_21 = arith.constant 0 : i32
    %33 = arith.cmpi ne, %32, %c0_i32_21 : i32
    %c0_i32_22 = arith.constant 0 : i32
    %34 = arith.cmpi slt, %32, %c0_i32_22 : i32
    %c0_i32_23 = arith.constant 0 : i32
    %35 = arith.cmpi slt, %31, %c0_i32_23 : i32
    %36 = arith.xori %34, %35 : i1
    %37 = arith.andi %36, %33 : i1
    %38 = arith.addi %32, %31 : i32
    %39 = arith.select %37, %38, %32 : i32
    %c1_i32_24 = arith.constant 1 : i32
    %40 = arith.addi %arg1, %c1_i32_24 : i32
    %c7_i32_25 = arith.constant 7 : i32
    %41 = arith.minsi %40, %c7_i32_25 : i32
    %c4_i32_26 = arith.constant 4 : i32
    %c0_i32_27 = arith.constant 0 : i32
    %42 = arith.cmpi eq, %c4_i32_26, %c0_i32_27 : i32
    %c1_i32_28 = arith.constant 1 : i32
    %43 = arith.select %42, %c1_i32_28, %c4_i32_26 : i32
    %44 = arith.remsi %41, %43 : i32
    %c0_i32_29 = arith.constant 0 : i32
    %45 = arith.cmpi ne, %44, %c0_i32_29 : i32
    %c0_i32_30 = arith.constant 0 : i32
    %46 = arith.cmpi slt, %44, %c0_i32_30 : i32
    %c0_i32_31 = arith.constant 0 : i32
    %47 = arith.cmpi slt, %43, %c0_i32_31 : i32
    %48 = arith.xori %46, %47 : i1
    %49 = arith.andi %48, %45 : i1
    %50 = arith.addi %44, %43 : i32
    %51 = arith.select %49, %50, %44 : i32
    %c0 = arith.constant 0 : index
    %c0_32 = arith.constant 0 : index
    %52 = vector.load %arg3[%c0, %c0_32] : memref<27x128xf32, #tpu.memory_space<vmem>>, vector<1x128xf32>
    %53 = vector.shape_cast %52 : vector<1x128xf32> to vector<128xf32>
    %54 = vector.broadcast %15 : f32 to vector<128xf32>
    %55 = arith.mulf %53, %54 : vector<128xf32>
    %c1 = arith.constant 1 : index
    %c0_33 = arith.constant 0 : index
    %56 = vector.load %arg3[%c1, %c0_33] : memref<27x128xf32, #tpu.memory_space<vmem>>, vector<1x128xf32>
    %57 = vector.shape_cast %56 : vector<1x128xf32> to vector<128xf32>
    %58 = vector.broadcast %15 : f32 to vector<128xf32>
    %59 = arith.mulf %57, %58 : vector<128xf32>
    %c2 = arith.constant 2 : index
    %c0_34 = arith.constant 0 : index
    %60 = vector.load %arg3[%c2, %c0_34] : memref<27x128xf32, #tpu.memory_space<vmem>>, vector<1x128xf32>
    %61 = vector.shape_cast %60 : vector<1x128xf32> to vector<128xf32>
    %62 = vector.broadcast %15 : f32 to vector<128xf32>
    %63 = arith.mulf %61, %62 : vector<128xf32>
    %c3 = arith.constant 3 : index
    %c0_35 = arith.constant 0 : index
    %64 = vector.load %arg3[%c3, %c0_35] : memref<27x128xf32, #tpu.memory_space<vmem>>, vector<1x128xf32>
    %65 = vector.shape_cast %64 : vector<1x128xf32> to vector<128xf32>
    %66 = vector.broadcast %15 : f32 to vector<128xf32>
    %67 = arith.mulf %65, %66 : vector<128xf32>
    %c4 = arith.constant 4 : index
    %c0_36 = arith.constant 0 : index
    %68 = vector.load %arg3[%c4, %c0_36] : memref<27x128xf32, #tpu.memory_space<vmem>>, vector<1x128xf32>
    %69 = vector.shape_cast %68 : vector<1x128xf32> to vector<128xf32>
    %70 = vector.broadcast %15 : f32 to vector<128xf32>
    %71 = arith.mulf %69, %70 : vector<128xf32>
    %c5 = arith.constant 5 : index
    %c0_37 = arith.constant 0 : index
    %72 = vector.load %arg3[%c5, %c0_37] : memref<27x128xf32, #tpu.memory_space<vmem>>, vector<1x128xf32>
    %73 = vector.shape_cast %72 : vector<1x128xf32> to vector<128xf32>
    %74 = vector.broadcast %15 : f32 to vector<128xf32>
    %75 = arith.mulf %73, %74 : vector<128xf32>
    %c6 = arith.constant 6 : index
    %c0_38 = arith.constant 0 : index
    %76 = vector.load %arg3[%c6, %c0_38] : memref<27x128xf32, #tpu.memory_space<vmem>>, vector<1x128xf32>
    %77 = vector.shape_cast %76 : vector<1x128xf32> to vector<128xf32>
    %78 = vector.broadcast %15 : f32 to vector<128xf32>
    %79 = arith.mulf %77, %78 : vector<128xf32>
    %c7 = arith.constant 7 : index
    %c0_39 = arith.constant 0 : index
    %80 = vector.load %arg3[%c7, %c0_39] : memref<27x128xf32, #tpu.memory_space<vmem>>, vector<1x128xf32>
    %81 = vector.shape_cast %80 : vector<1x128xf32> to vector<128xf32>
    %82 = vector.broadcast %15 : f32 to vector<128xf32>
    %83 = arith.mulf %81, %82 : vector<128xf32>
    %c8 = arith.constant 8 : index
    %c0_40 = arith.constant 0 : index
    %84 = vector.load %arg3[%c8, %c0_40] : memref<27x128xf32, #tpu.memory_space<vmem>>, vector<1x128xf32>
    %85 = vector.shape_cast %84 : vector<1x128xf32> to vector<128xf32>
    %86 = vector.broadcast %15 : f32 to vector<128xf32>
    %87 = arith.mulf %85, %86 : vector<128xf32>
    %c9 = arith.constant 9 : index
    %c0_41 = arith.constant 0 : index
    %88 = vector.load %arg3[%c9, %c0_41] : memref<27x128xf32, #tpu.memory_space<vmem>>, vector<1x128xf32>
    %89 = vector.shape_cast %88 : vector<1x128xf32> to vector<128xf32>
    %c10 = arith.constant 10 : index
    %c0_42 = arith.constant 0 : index
    %90 = vector.load %arg3[%c10, %c0_42] : memref<27x128xf32, #tpu.memory_space<vmem>>, vector<1x128xf32>
    %91 = vector.shape_cast %90 : vector<1x128xf32> to vector<128xf32>
    %c11 = arith.constant 11 : index
    %c0_43 = arith.constant 0 : index
    %92 = vector.load %arg3[%c11, %c0_43] : memref<27x128xf32, #tpu.memory_space<vmem>>, vector<1x128xf32>
    %93 = vector.shape_cast %92 : vector<1x128xf32> to vector<128xf32>
    %c12 = arith.constant 12 : index
    %c0_44 = arith.constant 0 : index
    %94 = vector.load %arg3[%c12, %c0_44] : memref<27x128xf32, #tpu.memory_space<vmem>>, vector<1x128xf32>
    %95 = vector.shape_cast %94 : vector<1x128xf32> to vector<128xf32>
    %c13 = arith.constant 13 : index
    %c0_45 = arith.constant 0 : index
    %96 = vector.load %arg3[%c13, %c0_45] : memref<27x128xf32, #tpu.memory_space<vmem>>, vector<1x128xf32>
    %97 = vector.shape_cast %96 : vector<1x128xf32> to vector<128xf32>
    %c14 = arith.constant 14 : index
    %c0_46 = arith.constant 0 : index
    %98 = vector.load %arg3[%c14, %c0_46] : memref<27x128xf32, #tpu.memory_space<vmem>>, vector<1x128xf32>
    %99 = vector.shape_cast %98 : vector<1x128xf32> to vector<128xf32>
    %c15 = arith.constant 15 : index
    %c0_47 = arith.constant 0 : index
    %100 = vector.load %arg3[%c15, %c0_47] : memref<27x128xf32, #tpu.memory_space<vmem>>, vector<1x128xf32>
    %101 = vector.shape_cast %100 : vector<1x128xf32> to vector<128xf32>
    %c16 = arith.constant 16 : index
    %c0_48 = arith.constant 0 : index
    %102 = vector.load %arg3[%c16, %c0_48] : memref<27x128xf32, #tpu.memory_space<vmem>>, vector<1x128xf32>
    %103 = vector.shape_cast %102 : vector<1x128xf32> to vector<128xf32>
    %c17 = arith.constant 17 : index
    %c0_49 = arith.constant 0 : index
    %104 = vector.load %arg3[%c17, %c0_49] : memref<27x128xf32, #tpu.memory_space<vmem>>, vector<1x128xf32>
    %105 = vector.shape_cast %104 : vector<1x128xf32> to vector<128xf32>
    %c18 = arith.constant 18 : index
    %c0_50 = arith.constant 0 : index
    %106 = vector.load %arg3[%c18, %c0_50] : memref<27x128xf32, #tpu.memory_space<vmem>>, vector<1x128xf32>
    %107 = vector.shape_cast %106 : vector<1x128xf32> to vector<128xf32>
    %108 = vector.broadcast %17 : f32 to vector<128xf32>
    %109 = arith.mulf %107, %108 : vector<128xf32>
    %c19 = arith.constant 19 : index
    %c0_51 = arith.constant 0 : index
    %110 = vector.load %arg3[%c19, %c0_51] : memref<27x128xf32, #tpu.memory_space<vmem>>, vector<1x128xf32>
    %111 = vector.shape_cast %110 : vector<1x128xf32> to vector<128xf32>
    %112 = vector.broadcast %17 : f32 to vector<128xf32>
    %113 = arith.mulf %111, %112 : vector<128xf32>
    %c20 = arith.constant 20 : index
    %c0_52 = arith.constant 0 : index
    %114 = vector.load %arg3[%c20, %c0_52] : memref<27x128xf32, #tpu.memory_space<vmem>>, vector<1x128xf32>
    %115 = vector.shape_cast %114 : vector<1x128xf32> to vector<128xf32>
    %116 = vector.broadcast %17 : f32 to vector<128xf32>
    %117 = arith.mulf %115, %116 : vector<128xf32>
    %c21 = arith.constant 21 : index
    %c0_53 = arith.constant 0 : index
    %118 = vector.load %arg3[%c21, %c0_53] : memref<27x128xf32, #tpu.memory_space<vmem>>, vector<1x128xf32>
    %119 = vector.shape_cast %118 : vector<1x128xf32> to vector<128xf32>
    %120 = vector.broadcast %17 : f32 to vector<128xf32>
    %121 = arith.mulf %119, %120 : vector<128xf32>
    %c22 = arith.constant 22 : index
    %c0_54 = arith.constant 0 : index
    %122 = vector.load %arg3[%c22, %c0_54] : memref<27x128xf32, #tpu.memory_space<vmem>>, vector<1x128xf32>
    %123 = vector.shape_cast %122 : vector<1x128xf32> to vector<128xf32>
    %124 = vector.broadcast %17 : f32 to vector<128xf32>
    %125 = arith.mulf %123, %124 : vector<128xf32>
    %c23 = arith.constant 23 : index
    %c0_55 = arith.constant 0 : index
    %126 = vector.load %arg3[%c23, %c0_55] : memref<27x128xf32, #tpu.memory_space<vmem>>, vector<1x128xf32>
    %127 = vector.shape_cast %126 : vector<1x128xf32> to vector<128xf32>
    %128 = vector.broadcast %17 : f32 to vector<128xf32>
    %129 = arith.mulf %127, %128 : vector<128xf32>
    %c24 = arith.constant 24 : index
    %c0_56 = arith.constant 0 : index
    %130 = vector.load %arg3[%c24, %c0_56] : memref<27x128xf32, #tpu.memory_space<vmem>>, vector<1x128xf32>
    %131 = vector.shape_cast %130 : vector<1x128xf32> to vector<128xf32>
    %132 = vector.broadcast %17 : f32 to vector<128xf32>
    %133 = arith.mulf %131, %132 : vector<128xf32>
    %c25 = arith.constant 25 : index
    %c0_57 = arith.constant 0 : index
    %134 = vector.load %arg3[%c25, %c0_57] : memref<27x128xf32, #tpu.memory_space<vmem>>, vector<1x128xf32>
    %135 = vector.shape_cast %134 : vector<1x128xf32> to vector<128xf32>
    %136 = vector.broadcast %17 : f32 to vector<128xf32>
    %137 = arith.mulf %135, %136 : vector<128xf32>
    %c26 = arith.constant 26 : index
    %c0_58 = arith.constant 0 : index
    %138 = vector.load %arg3[%c26, %c0_58] : memref<27x128xf32, #tpu.memory_space<vmem>>, vector<1x128xf32>
    %139 = vector.shape_cast %138 : vector<1x128xf32> to vector<128xf32>
    %140 = vector.broadcast %17 : f32 to vector<128xf32>
    %141 = arith.mulf %139, %140 : vector<128xf32>
    %c0_59 = arith.constant 0 : index
    %c0_60 = arith.constant 0 : index
    %142 = vector.load %arg4[%c0_59, %c0_60] : memref<1x128xf32, #tpu.memory_space<vmem>>, vector<1x128xf32>
    %143 = vector.shape_cast %142 : vector<1x128xf32> to vector<128xf32>
    %144 = arith.index_cast %29 : i32 to index
    %c0_61 = arith.constant 0 : index
    %c0_62 = arith.constant 0 : index
    %c0_63 = arith.constant 0 : index
    %145 = vector.load %arg6[%144, %c0_61, %c0_62, %c0_63] : memref<4x8x17x128xf32, #tpu.memory_space<vmem>>, vector<1x6x17x128xf32>
    %146 = vector.shape_cast %145 : vector<1x6x17x128xf32> to vector<6x17x128xf32>
    %147 = vector.extract_strided_slice %146 {offsets = [0, 7, 0], sizes = [6, 8, 128], strides = [1, 1, 1]} : vector<6x17x128xf32> to vector<6x8x128xf32>
    %148 = vector.extract_strided_slice %147 {offsets = [0, 0, 0], sizes = [4, 8, 128], strides = [1, 1, 1]} : vector<6x8x128xf32> to vector<4x8x128xf32>
    %149 = vector.shape_cast %55 : vector<128xf32> to vector<1x1x128xf32>
    %150 = vector.broadcast %149 : vector<1x1x128xf32> to vector<4x8x128xf32>
    %151 = arith.mulf %148, %150 : vector<4x8x128xf32>
    %152 = vector.extract_strided_slice %147 {offsets = [1, 0, 0], sizes = [4, 8, 128], strides = [1, 1, 1]} : vector<6x8x128xf32> to vector<4x8x128xf32>
    %153 = vector.shape_cast %67 : vector<128xf32> to vector<1x1x128xf32>
    %154 = vector.broadcast %153 : vector<1x1x128xf32> to vector<4x8x128xf32>
    %155 = arith.mulf %152, %154 : vector<4x8x128xf32>
    %156 = arith.addf %151, %155 : vector<4x8x128xf32>
    %157 = vector.extract_strided_slice %147 {offsets = [2, 0, 0], sizes = [4, 8, 128], strides = [1, 1, 1]} : vector<6x8x128xf32> to vector<4x8x128xf32>
    %158 = vector.shape_cast %79 : vector<128xf32> to vector<1x1x128xf32>
    %159 = vector.broadcast %158 : vector<1x1x128xf32> to vector<4x8x128xf32>
    %160 = arith.mulf %157, %159 : vector<4x8x128xf32>
    %161 = arith.addf %156, %160 : vector<4x8x128xf32>
    %162 = vector.extract_strided_slice %146 {offsets = [0, 8, 0], sizes = [6, 8, 128], strides = [1, 1, 1]} : vector<6x17x128xf32> to vector<6x8x128xf32>
    %163 = vector.extract_strided_slice %162 {offsets = [0, 0, 0], sizes = [4, 8, 128], strides = [1, 1, 1]} : vector<6x8x128xf32> to vector<4x8x128xf32>
    %164 = vector.shape_cast %59 : vector<128xf32> to vector<1x1x128xf32>
    %165 = vector.broadcast %164 : vector<1x1x128xf32> to vector<4x8x128xf32>
    %166 = arith.mulf %163, %165 : vector<4x8x128xf32>
    %167 = arith.addf %161, %166 : vector<4x8x128xf32>
    %168 = vector.extract_strided_slice %162 {offsets = [1, 0, 0], sizes = [4, 8, 128], strides = [1, 1, 1]} : vector<6x8x128xf32> to vector<4x8x128xf32>
    %169 = vector.shape_cast %71 : vector<128xf32> to vector<1x1x128xf32>
    %170 = vector.broadcast %169 : vector<1x1x128xf32> to vector<4x8x128xf32>
    %171 = arith.mulf %168, %170 : vector<4x8x128xf32>
    %172 = arith.addf %167, %171 : vector<4x8x128xf32>
    %173 = vector.extract_strided_slice %162 {offsets = [2, 0, 0], sizes = [4, 8, 128], strides = [1, 1, 1]} : vector<6x8x128xf32> to vector<4x8x128xf32>
    %174 = vector.shape_cast %83 : vector<128xf32> to vector<1x1x128xf32>
    %175 = vector.broadcast %174 : vector<1x1x128xf32> to vector<4x8x128xf32>
    %176 = arith.mulf %173, %175 : vector<4x8x128xf32>
    %177 = arith.addf %172, %176 : vector<4x8x128xf32>
    %178 = vector.extract_strided_slice %146 {offsets = [0, 9, 0], sizes = [6, 8, 128], strides = [1, 1, 1]} : vector<6x17x128xf32> to vector<6x8x128xf32>
    %179 = vector.extract_strided_slice %178 {offsets = [0, 0, 0], sizes = [4, 8, 128], strides = [1, 1, 1]} : vector<6x8x128xf32> to vector<4x8x128xf32>
    %180 = vector.shape_cast %63 : vector<128xf32> to vector<1x1x128xf32>
    %181 = vector.broadcast %180 : vector<1x1x128xf32> to vector<4x8x128xf32>
    %182 = arith.mulf %179, %181 : vector<4x8x128xf32>
    %183 = arith.addf %177, %182 : vector<4x8x128xf32>
    %184 = vector.extract_strided_slice %178 {offsets = [1, 0, 0], sizes = [4, 8, 128], strides = [1, 1, 1]} : vector<6x8x128xf32> to vector<4x8x128xf32>
    %185 = vector.shape_cast %75 : vector<128xf32> to vector<1x1x128xf32>
    %186 = vector.broadcast %185 : vector<1x1x128xf32> to vector<4x8x128xf32>
    %187 = arith.mulf %184, %186 : vector<4x8x128xf32>
    %188 = arith.addf %183, %187 : vector<4x8x128xf32>
    %189 = vector.extract_strided_slice %178 {offsets = [2, 0, 0], sizes = [4, 8, 128], strides = [1, 1, 1]} : vector<6x8x128xf32> to vector<4x8x128xf32>
    %190 = vector.shape_cast %87 : vector<128xf32> to vector<1x1x128xf32>
    %191 = vector.broadcast %190 : vector<1x1x128xf32> to vector<4x8x128xf32>
    %192 = arith.mulf %189, %191 : vector<4x8x128xf32>
    %193 = arith.addf %188, %192 : vector<4x8x128xf32>
    %194 = arith.index_cast %39 : i32 to index
    %c0_64 = arith.constant 0 : index
    %c0_65 = arith.constant 0 : index
    %c0_66 = arith.constant 0 : index
    %195 = vector.load %arg6[%194, %c0_64, %c0_65, %c0_66] : memref<4x8x17x128xf32, #tpu.memory_space<vmem>>, vector<1x6x17x128xf32>
    %196 = vector.shape_cast %195 : vector<1x6x17x128xf32> to vector<6x17x128xf32>
    %197 = vector.extract_strided_slice %196 {offsets = [0, 7, 0], sizes = [6, 8, 128], strides = [1, 1, 1]} : vector<6x17x128xf32> to vector<6x8x128xf32>
    %198 = vector.extract_strided_slice %197 {offsets = [0, 0, 0], sizes = [4, 8, 128], strides = [1, 1, 1]} : vector<6x8x128xf32> to vector<4x8x128xf32>
    %199 = vector.shape_cast %89 : vector<128xf32> to vector<1x1x128xf32>
    %200 = vector.broadcast %199 : vector<1x1x128xf32> to vector<4x8x128xf32>
    %201 = arith.mulf %198, %200 : vector<4x8x128xf32>
    %202 = arith.addf %193, %201 : vector<4x8x128xf32>
    %203 = vector.extract_strided_slice %197 {offsets = [1, 0, 0], sizes = [4, 8, 128], strides = [1, 1, 1]} : vector<6x8x128xf32> to vector<4x8x128xf32>
    %204 = vector.shape_cast %95 : vector<128xf32> to vector<1x1x128xf32>
    %205 = vector.broadcast %204 : vector<1x1x128xf32> to vector<4x8x128xf32>
    %206 = arith.mulf %203, %205 : vector<4x8x128xf32>
    %207 = arith.addf %202, %206 : vector<4x8x128xf32>
    %208 = vector.extract_strided_slice %197 {offsets = [2, 0, 0], sizes = [4, 8, 128], strides = [1, 1, 1]} : vector<6x8x128xf32> to vector<4x8x128xf32>
    %209 = vector.shape_cast %101 : vector<128xf32> to vector<1x1x128xf32>
    %210 = vector.broadcast %209 : vector<1x1x128xf32> to vector<4x8x128xf32>
    %211 = arith.mulf %208, %210 : vector<4x8x128xf32>
    %212 = arith.addf %207, %211 : vector<4x8x128xf32>
    %213 = vector.extract_strided_slice %196 {offsets = [0, 8, 0], sizes = [6, 8, 128], strides = [1, 1, 1]} : vector<6x17x128xf32> to vector<6x8x128xf32>
    %214 = vector.extract_strided_slice %213 {offsets = [0, 0, 0], sizes = [4, 8, 128], strides = [1, 1, 1]} : vector<6x8x128xf32> to vector<4x8x128xf32>
    %215 = vector.shape_cast %91 : vector<128xf32> to vector<1x1x128xf32>
    %216 = vector.broadcast %215 : vector<1x1x128xf32> to vector<4x8x128xf32>
    %217 = arith.mulf %214, %216 : vector<4x8x128xf32>
    %218 = arith.addf %212, %217 : vector<4x8x128xf32>
    %219 = vector.extract_strided_slice %213 {offsets = [1, 0, 0], sizes = [4, 8, 128], strides = [1, 1, 1]} : vector<6x8x128xf32> to vector<4x8x128xf32>
    %220 = vector.shape_cast %97 : vector<128xf32> to vector<1x1x128xf32>
    %221 = vector.broadcast %220 : vector<1x1x128xf32> to vector<4x8x128xf32>
    %222 = arith.mulf %219, %221 : vector<4x8x128xf32>
    %223 = arith.addf %218, %222 : vector<4x8x128xf32>
    %224 = vector.extract_strided_slice %213 {offsets = [2, 0, 0], sizes = [4, 8, 128], strides = [1, 1, 1]} : vector<6x8x128xf32> to vector<4x8x128xf32>
    %225 = vector.shape_cast %103 : vector<128xf32> to vector<1x1x128xf32>
    %226 = vector.broadcast %225 : vector<1x1x128xf32> to vector<4x8x128xf32>
    %227 = arith.mulf %224, %226 : vector<4x8x128xf32>
    %228 = arith.addf %223, %227 : vector<4x8x128xf32>
    %229 = vector.extract_strided_slice %196 {offsets = [0, 9, 0], sizes = [6, 8, 128], strides = [1, 1, 1]} : vector<6x17x128xf32> to vector<6x8x128xf32>
    %230 = vector.extract_strided_slice %229 {offsets = [0, 0, 0], sizes = [4, 8, 128], strides = [1, 1, 1]} : vector<6x8x128xf32> to vector<4x8x128xf32>
    %231 = vector.shape_cast %93 : vector<128xf32> to vector<1x1x128xf32>
    %232 = vector.broadcast %231 : vector<1x1x128xf32> to vector<4x8x128xf32>
    %233 = arith.mulf %230, %232 : vector<4x8x128xf32>
    %234 = arith.addf %228, %233 : vector<4x8x128xf32>
    %235 = vector.extract_strided_slice %229 {offsets = [1, 0, 0], sizes = [4, 8, 128], strides = [1, 1, 1]} : vector<6x8x128xf32> to vector<4x8x128xf32>
    %236 = vector.shape_cast %99 : vector<128xf32> to vector<1x1x128xf32>
    %237 = vector.broadcast %236 : vector<1x1x128xf32> to vector<4x8x128xf32>
    %238 = arith.mulf %235, %237 : vector<4x8x128xf32>
    %239 = arith.addf %234, %238 : vector<4x8x128xf32>
    %240 = vector.extract_strided_slice %229 {offsets = [2, 0, 0], sizes = [4, 8, 128], strides = [1, 1, 1]} : vector<6x8x128xf32> to vector<4x8x128xf32>
    %241 = vector.shape_cast %105 : vector<128xf32> to vector<1x1x128xf32>
    %242 = vector.broadcast %241 : vector<1x1x128xf32> to vector<4x8x128xf32>
    %243 = arith.mulf %240, %242 : vector<4x8x128xf32>
    %244 = arith.addf %239, %243 : vector<4x8x128xf32>
    %245 = arith.index_cast %51 : i32 to index
    %c0_67 = arith.constant 0 : index
    %c0_68 = arith.constant 0 : index
    %c0_69 = arith.constant 0 : index
    %246 = vector.load %arg6[%245, %c0_67, %c0_68, %c0_69] : memref<4x8x17x128xf32, #tpu.memory_space<vmem>>, vector<1x6x17x128xf32>
    %247 = vector.shape_cast %246 : vector<1x6x17x128xf32> to vector<6x17x128xf32>
    %248 = vector.extract_strided_slice %247 {offsets = [0, 7, 0], sizes = [6, 8, 128], strides = [1, 1, 1]} : vector<6x17x128xf32> to vector<6x8x128xf32>
    %249 = vector.extract_strided_slice %248 {offsets = [0, 0, 0], sizes = [4, 8, 128], strides = [1, 1, 1]} : vector<6x8x128xf32> to vector<4x8x128xf32>
    %250 = vector.shape_cast %109 : vector<128xf32> to vector<1x1x128xf32>
    %251 = vector.broadcast %250 : vector<1x1x128xf32> to vector<4x8x128xf32>
    %252 = arith.mulf %249, %251 : vector<4x8x128xf32>
    %253 = arith.addf %244, %252 : vector<4x8x128xf32>
    %254 = vector.extract_strided_slice %248 {offsets = [1, 0, 0], sizes = [4, 8, 128], strides = [1, 1, 1]} : vector<6x8x128xf32> to vector<4x8x128xf32>
    %255 = vector.shape_cast %121 : vector<128xf32> to vector<1x1x128xf32>
    %256 = vector.broadcast %255 : vector<1x1x128xf32> to vector<4x8x128xf32>
    %257 = arith.mulf %254, %256 : vector<4x8x128xf32>
    %258 = arith.addf %253, %257 : vector<4x8x128xf32>
    %259 = vector.extract_strided_slice %248 {offsets = [2, 0, 0], sizes = [4, 8, 128], strides = [1, 1, 1]} : vector<6x8x128xf32> to vector<4x8x128xf32>
    %260 = vector.shape_cast %133 : vector<128xf32> to vector<1x1x128xf32>
    %261 = vector.broadcast %260 : vector<1x1x128xf32> to vector<4x8x128xf32>
    %262 = arith.mulf %259, %261 : vector<4x8x128xf32>
    %263 = arith.addf %258, %262 : vector<4x8x128xf32>
    %264 = vector.extract_strided_slice %247 {offsets = [0, 8, 0], sizes = [6, 8, 128], strides = [1, 1, 1]} : vector<6x17x128xf32> to vector<6x8x128xf32>
    %265 = vector.extract_strided_slice %264 {offsets = [0, 0, 0], sizes = [4, 8, 128], strides = [1, 1, 1]} : vector<6x8x128xf32> to vector<4x8x128xf32>
    %266 = vector.shape_cast %113 : vector<128xf32> to vector<1x1x128xf32>
    %267 = vector.broadcast %266 : vector<1x1x128xf32> to vector<4x8x128xf32>
    %268 = arith.mulf %265, %267 : vector<4x8x128xf32>
    %269 = arith.addf %263, %268 : vector<4x8x128xf32>
    %270 = vector.extract_strided_slice %264 {offsets = [1, 0, 0], sizes = [4, 8, 128], strides = [1, 1, 1]} : vector<6x8x128xf32> to vector<4x8x128xf32>
    %271 = vector.shape_cast %125 : vector<128xf32> to vector<1x1x128xf32>
    %272 = vector.broadcast %271 : vector<1x1x128xf32> to vector<4x8x128xf32>
    %273 = arith.mulf %270, %272 : vector<4x8x128xf32>
    %274 = arith.addf %269, %273 : vector<4x8x128xf32>
    %275 = vector.extract_strided_slice %264 {offsets = [2, 0, 0], sizes = [4, 8, 128], strides = [1, 1, 1]} : vector<6x8x128xf32> to vector<4x8x128xf32>
    %276 = vector.shape_cast %137 : vector<128xf32> to vector<1x1x128xf32>
    %277 = vector.broadcast %276 : vector<1x1x128xf32> to vector<4x8x128xf32>
    %278 = arith.mulf %275, %277 : vector<4x8x128xf32>
    %279 = arith.addf %274, %278 : vector<4x8x128xf32>
    %280 = vector.extract_strided_slice %247 {offsets = [0, 9, 0], sizes = [6, 8, 128], strides = [1, 1, 1]} : vector<6x17x128xf32> to vector<6x8x128xf32>
    %281 = vector.extract_strided_slice %280 {offsets = [0, 0, 0], sizes = [4, 8, 128], strides = [1, 1, 1]} : vector<6x8x128xf32> to vector<4x8x128xf32>
    %282 = vector.shape_cast %117 : vector<128xf32> to vector<1x1x128xf32>
    %283 = vector.broadcast %282 : vector<1x1x128xf32> to vector<4x8x128xf32>
    %284 = arith.mulf %281, %283 : vector<4x8x128xf32>
    %285 = arith.addf %279, %284 : vector<4x8x128xf32>
    %286 = vector.extract_strided_slice %280 {offsets = [1, 0, 0], sizes = [4, 8, 128], strides = [1, 1, 1]} : vector<6x8x128xf32> to vector<4x8x128xf32>
    %287 = vector.shape_cast %129 : vector<128xf32> to vector<1x1x128xf32>
    %288 = vector.broadcast %287 : vector<1x1x128xf32> to vector<4x8x128xf32>
    %289 = arith.mulf %286, %288 : vector<4x8x128xf32>
    %290 = arith.addf %285, %289 : vector<4x8x128xf32>
    %291 = vector.extract_strided_slice %280 {offsets = [2, 0, 0], sizes = [4, 8, 128], strides = [1, 1, 1]} : vector<6x8x128xf32> to vector<4x8x128xf32>
    %292 = vector.shape_cast %141 : vector<128xf32> to vector<1x1x128xf32>
    %293 = vector.broadcast %292 : vector<1x1x128xf32> to vector<4x8x128xf32>
    %294 = arith.mulf %291, %293 : vector<4x8x128xf32>
    %295 = arith.addf %290, %294 : vector<4x8x128xf32>
    %296 = vector.shape_cast %143 : vector<128xf32> to vector<1x1x128xf32>
    %297 = vector.broadcast %296 : vector<1x1x128xf32> to vector<4x8x128xf32>
    %298 = arith.addf %295, %297 : vector<4x8x128xf32>
    %c0_70 = arith.constant 0 : index
    %c0_71 = arith.constant 0 : index
    %c0_72 = arith.constant 0 : index
    %c0_73 = arith.constant 0 : index
    %c0_74 = arith.constant 0 : index
    %299 = vector.load %arg5[%c0_70, %c0_71, %c0_72, %c0_73, %c0_74] : memref<1x1x6x8x128xf32, #tpu.memory_space<vmem>>, vector<1x1x4x8x128xf32>
    %300 = vector.shape_cast %299 : vector<1x1x4x8x128xf32> to vector<4x8x128xf32>
    %301 = vector.shape_cast %298 : vector<4x8x128xf32> to vector<1x1x4x8x128xf32>
    tpu.vector_store %arg5[%c0_70, %c0_71, %c0_72, %c0_73, %c0_74], %301 {strides = array<i32>} : memref<1x1x6x8x128xf32, #tpu.memory_space<vmem>>, vector<1x1x4x8x128xf32>,
    %302 = arith.index_cast %29 : i32 to index
    %c4_75 = arith.constant 4 : index
    %c0_76 = arith.constant 0 : index
    %c0_77 = arith.constant 0 : index
    %303 = vector.load %arg6[%302, %c4_75, %c0_76, %c0_77] : memref<4x8x17x128xf32, #tpu.memory_space<vmem>>, vector<1x4x17x128xf32>
    %304 = vector.shape_cast %303 : vector<1x4x17x128xf32> to vector<4x17x128xf32>
    %305 = vector.extract_strided_slice %304 {offsets = [0, 7, 0], sizes = [4, 8, 128], strides = [1, 1, 1]} : vector<4x17x128xf32> to vector<4x8x128xf32>
    %306 = vector.extract_strided_slice %305 {offsets = [0, 0, 0], sizes = [2, 8, 128], strides = [1, 1, 1]} : vector<4x8x128xf32> to vector<2x8x128xf32>
    %307 = vector.shape_cast %55 : vector<128xf32> to vector<1x1x128xf32>
    %308 = vector.broadcast %307 : vector<1x1x128xf32> to vector<2x8x128xf32>
    %309 = arith.mulf %306, %308 : vector<2x8x128xf32>
    %310 = vector.extract_strided_slice %305 {offsets = [1, 0, 0], sizes = [2, 8, 128], strides = [1, 1, 1]} : vector<4x8x128xf32> to vector<2x8x128xf32>
    %311 = vector.shape_cast %67 : vector<128xf32> to vector<1x1x128xf32>
    %312 = vector.broadcast %311 : vector<1x1x128xf32> to vector<2x8x128xf32>
    %313 = arith.mulf %310, %312 : vector<2x8x128xf32>
    %314 = arith.addf %309, %313 : vector<2x8x128xf32>
    %315 = vector.extract_strided_slice %305 {offsets = [2, 0, 0], sizes = [2, 8, 128], strides = [1, 1, 1]} : vector<4x8x128xf32> to vector<2x8x128xf32>
    %316 = vector.shape_cast %79 : vector<128xf32> to vector<1x1x128xf32>
    %317 = vector.broadcast %316 : vector<1x1x128xf32> to vector<2x8x128xf32>
    %318 = arith.mulf %315, %317 : vector<2x8x128xf32>
    %319 = arith.addf %314, %318 : vector<2x8x128xf32>
    %320 = vector.extract_strided_slice %304 {offsets = [0, 8, 0], sizes = [4, 8, 128], strides = [1, 1, 1]} : vector<4x17x128xf32> to vector<4x8x128xf32>
    %321 = vector.extract_strided_slice %320 {offsets = [0, 0, 0], sizes = [2, 8, 128], strides = [1, 1, 1]} : vector<4x8x128xf32> to vector<2x8x128xf32>
    %322 = vector.shape_cast %59 : vector<128xf32> to vector<1x1x128xf32>
    %323 = vector.broadcast %322 : vector<1x1x128xf32> to vector<2x8x128xf32>
    %324 = arith.mulf %321, %323 : vector<2x8x128xf32>
    %325 = arith.addf %319, %324 : vector<2x8x128xf32>
    %326 = vector.extract_strided_slice %320 {offsets = [1, 0, 0], sizes = [2, 8, 128], strides = [1, 1, 1]} : vector<4x8x128xf32> to vector<2x8x128xf32>
    %327 = vector.shape_cast %71 : vector<128xf32> to vector<1x1x128xf32>
    %328 = vector.broadcast %327 : vector<1x1x128xf32> to vector<2x8x128xf32>
    %329 = arith.mulf %326, %328 : vector<2x8x128xf32>
    %330 = arith.addf %325, %329 : vector<2x8x128xf32>
    %331 = vector.extract_strided_slice %320 {offsets = [2, 0, 0], sizes = [2, 8, 128], strides = [1, 1, 1]} : vector<4x8x128xf32> to vector<2x8x128xf32>
    %332 = vector.shape_cast %83 : vector<128xf32> to vector<1x1x128xf32>
    %333 = vector.broadcast %332 : vector<1x1x128xf32> to vector<2x8x128xf32>
    %334 = arith.mulf %331, %333 : vector<2x8x128xf32>
    %335 = arith.addf %330, %334 : vector<2x8x128xf32>
    %336 = vector.extract_strided_slice %304 {offsets = [0, 9, 0], sizes = [4, 8, 128], strides = [1, 1, 1]} : vector<4x17x128xf32> to vector<4x8x128xf32>
    %337 = vector.extract_strided_slice %336 {offsets = [0, 0, 0], sizes = [2, 8, 128], strides = [1, 1, 1]} : vector<4x8x128xf32> to vector<2x8x128xf32>
    %338 = vector.shape_cast %63 : vector<128xf32> to vector<1x1x128xf32>
    %339 = vector.broadcast %338 : vector<1x1x128xf32> to vector<2x8x128xf32>
    %340 = arith.mulf %337, %339 : vector<2x8x128xf32>
    %341 = arith.addf %335, %340 : vector<2x8x128xf32>
    %342 = vector.extract_strided_slice %336 {offsets = [1, 0, 0], sizes = [2, 8, 128], strides = [1, 1, 1]} : vector<4x8x128xf32> to vector<2x8x128xf32>
    %343 = vector.shape_cast %75 : vector<128xf32> to vector<1x1x128xf32>
    %344 = vector.broadcast %343 : vector<1x1x128xf32> to vector<2x8x128xf32>
    %345 = arith.mulf %342, %344 : vector<2x8x128xf32>
    %346 = arith.addf %341, %345 : vector<2x8x128xf32>
    %347 = vector.extract_strided_slice %336 {offsets = [2, 0, 0], sizes = [2, 8, 128], strides = [1, 1, 1]} : vector<4x8x128xf32> to vector<2x8x128xf32>
    %348 = vector.shape_cast %87 : vector<128xf32> to vector<1x1x128xf32>
    %349 = vector.broadcast %348 : vector<1x1x128xf32> to vector<2x8x128xf32>
    %350 = arith.mulf %347, %349 : vector<2x8x128xf32>
    %351 = arith.addf %346, %350 : vector<2x8x128xf32>
    %352 = arith.index_cast %39 : i32 to index
    %c4_78 = arith.constant 4 : index
    %c0_79 = arith.constant 0 : index
    %c0_80 = arith.constant 0 : index
    %353 = vector.load %arg6[%352, %c4_78, %c0_79, %c0_80] : memref<4x8x17x128xf32, #tpu.memory_space<vmem>>, vector<1x4x17x128xf32>
    %354 = vector.shape_cast %353 : vector<1x4x17x128xf32> to vector<4x17x128xf32>
    %355 = vector.extract_strided_slice %354 {offsets = [0, 7, 0], sizes = [4, 8, 128], strides = [1, 1, 1]} : vector<4x17x128xf32> to vector<4x8x128xf32>
    %356 = vector.extract_strided_slice %355 {offsets = [0, 0, 0], sizes = [2, 8, 128], strides = [1, 1, 1]} : vector<4x8x128xf32> to vector<2x8x128xf32>
    %357 = vector.shape_cast %89 : vector<128xf32> to vector<1x1x128xf32>
    %358 = vector.broadcast %357 : vector<1x1x128xf32> to vector<2x8x128xf32>
    %359 = arith.mulf %356, %358 : vector<2x8x128xf32>
    %360 = arith.addf %351, %359 : vector<2x8x128xf32>
    %361 = vector.extract_strided_slice %355 {offsets = [1, 0, 0], sizes = [2, 8, 128], strides = [1, 1, 1]} : vector<4x8x128xf32> to vector<2x8x128xf32>
    %362 = vector.shape_cast %95 : vector<128xf32> to vector<1x1x128xf32>
    %363 = vector.broadcast %362 : vector<1x1x128xf32> to vector<2x8x128xf32>
    %364 = arith.mulf %361, %363 : vector<2x8x128xf32>
    %365 = arith.addf %360, %364 : vector<2x8x128xf32>
    %366 = vector.extract_strided_slice %355 {offsets = [2, 0, 0], sizes = [2, 8, 128], strides = [1, 1, 1]} : vector<4x8x128xf32> to vector<2x8x128xf32>
    %367 = vector.shape_cast %101 : vector<128xf32> to vector<1x1x128xf32>
    %368 = vector.broadcast %367 : vector<1x1x128xf32> to vector<2x8x128xf32>
    %369 = arith.mulf %366, %368 : vector<2x8x128xf32>
    %370 = arith.addf %365, %369 : vector<2x8x128xf32>
    %371 = vector.extract_strided_slice %354 {offsets = [0, 8, 0], sizes = [4, 8, 128], strides = [1, 1, 1]} : vector<4x17x128xf32> to vector<4x8x128xf32>
    %372 = vector.extract_strided_slice %371 {offsets = [0, 0, 0], sizes = [2, 8, 128], strides = [1, 1, 1]} : vector<4x8x128xf32> to vector<2x8x128xf32>
    %373 = vector.shape_cast %91 : vector<128xf32> to vector<1x1x128xf32>
    %374 = vector.broadcast %373 : vector<1x1x128xf32> to vector<2x8x128xf32>
    %375 = arith.mulf %372, %374 : vector<2x8x128xf32>
    %376 = arith.addf %370, %375 : vector<2x8x128xf32>
    %377 = vector.extract_strided_slice %371 {offsets = [1, 0, 0], sizes = [2, 8, 128], strides = [1, 1, 1]} : vector<4x8x128xf32> to vector<2x8x128xf32>
    %378 = vector.shape_cast %97 : vector<128xf32> to vector<1x1x128xf32>
    %379 = vector.broadcast %378 : vector<1x1x128xf32> to vector<2x8x128xf32>
    %380 = arith.mulf %377, %379 : vector<2x8x128xf32>
    %381 = arith.addf %376, %380 : vector<2x8x128xf32>
    %382 = vector.extract_strided_slice %371 {offsets = [2, 0, 0], sizes = [2, 8, 128], strides = [1, 1, 1]} : vector<4x8x128xf32> to vector<2x8x128xf32>
    %383 = vector.shape_cast %103 : vector<128xf32> to vector<1x1x128xf32>
    %384 = vector.broadcast %383 : vector<1x1x128xf32> to vector<2x8x128xf32>
    %385 = arith.mulf %382, %384 : vector<2x8x128xf32>
    %386 = arith.addf %381, %385 : vector<2x8x128xf32>
    %387 = vector.extract_strided_slice %354 {offsets = [0, 9, 0], sizes = [4, 8, 128], strides = [1, 1, 1]} : vector<4x17x128xf32> to vector<4x8x128xf32>
    %388 = vector.extract_strided_slice %387 {offsets = [0, 0, 0], sizes = [2, 8, 128], strides = [1, 1, 1]} : vector<4x8x128xf32> to vector<2x8x128xf32>
    %389 = vector.shape_cast %93 : vector<128xf32> to vector<1x1x128xf32>
    %390 = vector.broadcast %389 : vector<1x1x128xf32> to vector<2x8x128xf32>
    %391 = arith.mulf %388, %390 : vector<2x8x128xf32>
    %392 = arith.addf %386, %391 : vector<2x8x128xf32>
    %393 = vector.extract_strided_slice %387 {offsets = [1, 0, 0], sizes = [2, 8, 128], strides = [1, 1, 1]} : vector<4x8x128xf32> to vector<2x8x128xf32>
    %394 = vector.shape_cast %99 : vector<128xf32> to vector<1x1x128xf32>
    %395 = vector.broadcast %394 : vector<1x1x128xf32> to vector<2x8x128xf32>
    %396 = arith.mulf %393, %395 : vector<2x8x128xf32>
    %397 = arith.addf %392, %396 : vector<2x8x128xf32>
    %398 = vector.extract_strided_slice %387 {offsets = [2, 0, 0], sizes = [2, 8, 128], strides = [1, 1, 1]} : vector<4x8x128xf32> to vector<2x8x128xf32>
    %399 = vector.shape_cast %105 : vector<128xf32> to vector<1x1x128xf32>
    %400 = vector.broadcast %399 : vector<1x1x128xf32> to vector<2x8x128xf32>
    %401 = arith.mulf %398, %400 : vector<2x8x128xf32>
    %402 = arith.addf %397, %401 : vector<2x8x128xf32>
    %403 = arith.index_cast %51 : i32 to index
    %c4_81 = arith.constant 4 : index
    %c0_82 = arith.constant 0 : index
    %c0_83 = arith.constant 0 : index
    %404 = vector.load %arg6[%403, %c4_81, %c0_82, %c0_83] : memref<4x8x17x128xf32, #tpu.memory_space<vmem>>, vector<1x4x17x128xf32>
    %405 = vector.shape_cast %404 : vector<1x4x17x128xf32> to vector<4x17x128xf32>
    %406 = vector.extract_strided_slice %405 {offsets = [0, 7, 0], sizes = [4, 8, 128], strides = [1, 1, 1]} : vector<4x17x128xf32> to vector<4x8x128xf32>
    %407 = vector.extract_strided_slice %406 {offsets = [0, 0, 0], sizes = [2, 8, 128], strides = [1, 1, 1]} : vector<4x8x128xf32> to vector<2x8x128xf32>
    %408 = vector.shape_cast %109 : vector<128xf32> to vector<1x1x128xf32>
    %409 = vector.broadcast %408 : vector<1x1x128xf32> to vector<2x8x128xf32>
    %410 = arith.mulf %407, %409 : vector<2x8x128xf32>
    %411 = arith.addf %402, %410 : vector<2x8x128xf32>
    %412 = vector.extract_strided_slice %406 {offsets = [1, 0, 0], sizes = [2, 8, 128], strides = [1, 1, 1]} : vector<4x8x128xf32> to vector<2x8x128xf32>
    %413 = vector.shape_cast %121 : vector<128xf32> to vector<1x1x128xf32>
    %414 = vector.broadcast %413 : vector<1x1x128xf32> to vector<2x8x128xf32>
    %415 = arith.mulf %412, %414 : vector<2x8x128xf32>
    %416 = arith.addf %411, %415 : vector<2x8x128xf32>
    %417 = vector.extract_strided_slice %406 {offsets = [2, 0, 0], sizes = [2, 8, 128], strides = [1, 1, 1]} : vector<4x8x128xf32> to vector<2x8x128xf32>
    %418 = vector.shape_cast %133 : vector<128xf32> to vector<1x1x128xf32>
    %419 = vector.broadcast %418 : vector<1x1x128xf32> to vector<2x8x128xf32>
    %420 = arith.mulf %417, %419 : vector<2x8x128xf32>
    %421 = arith.addf %416, %420 : vector<2x8x128xf32>
    %422 = vector.extract_strided_slice %405 {offsets = [0, 8, 0], sizes = [4, 8, 128], strides = [1, 1, 1]} : vector<4x17x128xf32> to vector<4x8x128xf32>
    %423 = vector.extract_strided_slice %422 {offsets = [0, 0, 0], sizes = [2, 8, 128], strides = [1, 1, 1]} : vector<4x8x128xf32> to vector<2x8x128xf32>
    %424 = vector.shape_cast %113 : vector<128xf32> to vector<1x1x128xf32>
    %425 = vector.broadcast %424 : vector<1x1x128xf32> to vector<2x8x128xf32>
    %426 = arith.mulf %423, %425 : vector<2x8x128xf32>
    %427 = arith.addf %421, %426 : vector<2x8x128xf32>
    %428 = vector.extract_strided_slice %422 {offsets = [1, 0, 0], sizes = [2, 8, 128], strides = [1, 1, 1]} : vector<4x8x128xf32> to vector<2x8x128xf32>
    %429 = vector.shape_cast %125 : vector<128xf32> to vector<1x1x128xf32>
    %430 = vector.broadcast %429 : vector<1x1x128xf32> to vector<2x8x128xf32>
    %431 = arith.mulf %428, %430 : vector<2x8x128xf32>
    %432 = arith.addf %427, %431 : vector<2x8x128xf32>
    %433 = vector.extract_strided_slice %422 {offsets = [2, 0, 0], sizes = [2, 8, 128], strides = [1, 1, 1]} : vector<4x8x128xf32> to vector<2x8x128xf32>
    %434 = vector.shape_cast %137 : vector<128xf32> to vector<1x1x128xf32>
    %435 = vector.broadcast %434 : vector<1x1x128xf32> to vector<2x8x128xf32>
    %436 = arith.mulf %433, %435 : vector<2x8x128xf32>
    %437 = arith.addf %432, %436 : vector<2x8x128xf32>
    %438 = vector.extract_strided_slice %405 {offsets = [0, 9, 0], sizes = [4, 8, 128], strides = [1, 1, 1]} : vector<4x17x128xf32> to vector<4x8x128xf32>
    %439 = vector.extract_strided_slice %438 {offsets = [0, 0, 0], sizes = [2, 8, 128], strides = [1, 1, 1]} : vector<4x8x128xf32> to vector<2x8x128xf32>
    %440 = vector.shape_cast %117 : vector<128xf32> to vector<1x1x128xf32>
    %441 = vector.broadcast %440 : vector<1x1x128xf32> to vector<2x8x128xf32>
    %442 = arith.mulf %439, %441 : vector<2x8x128xf32>
    %443 = arith.addf %437, %442 : vector<2x8x128xf32>
    %444 = vector.extract_strided_slice %438 {offsets = [1, 0, 0], sizes = [2, 8, 128], strides = [1, 1, 1]} : vector<4x8x128xf32> to vector<2x8x128xf32>
    %445 = vector.shape_cast %129 : vector<128xf32> to vector<1x1x128xf32>
    %446 = vector.broadcast %445 : vector<1x1x128xf32> to vector<2x8x128xf32>
    %447 = arith.mulf %444, %446 : vector<2x8x128xf32>
    %448 = arith.addf %443, %447 : vector<2x8x128xf32>
    %449 = vector.extract_strided_slice %438 {offsets = [2, 0, 0], sizes = [2, 8, 128], strides = [1, 1, 1]} : vector<4x8x128xf32> to vector<2x8x128xf32>
    %450 = vector.shape_cast %141 : vector<128xf32> to vector<1x1x128xf32>
    %451 = vector.broadcast %450 : vector<1x1x128xf32> to vector<2x8x128xf32>
    %452 = arith.mulf %449, %451 : vector<2x8x128xf32>
    %453 = arith.addf %448, %452 : vector<2x8x128xf32>
    %454 = vector.shape_cast %143 : vector<128xf32> to vector<1x1x128xf32>
    %455 = vector.broadcast %454 : vector<1x1x128xf32> to vector<2x8x128xf32>
    %456 = arith.addf %453, %455 : vector<2x8x128xf32>
    %c0_84 = arith.constant 0 : index
    %c0_85 = arith.constant 0 : index
    %c4_86 = arith.constant 4 : index
    %c0_87 = arith.constant 0 : index
    %c0_88 = arith.constant 0 : index
    %457 = vector.load %arg5[%c0_84, %c0_85, %c4_86, %c0_87, %c0_88] : memref<1x1x6x8x128xf32, #tpu.memory_space<vmem>>, vector<1x1x2x8x128xf32>
    %458 = vector.shape_cast %457 : vector<1x1x2x8x128xf32> to vector<2x8x128xf32>
    %459 = vector.shape_cast %456 : vector<2x8x128xf32> to vector<1x1x2x8x128xf32>
    tpu.vector_store %arg5[%c0_84, %c0_85, %c4_86, %c0_87, %c0_88], %459 {strides = array<i32>} : memref<1x1x6x8x128xf32, #tpu.memory_space<vmem>>, vector<1x1x2x8x128xf32>,
    return
  }
  func.func @transform_1(%arg0: i32, %arg1: i32) -> (i32, i32) {
    %c0_i32 = arith.constant 0 : i32
    %c0_i32_0 = arith.constant 0 : i32
    %c0_i32_1 = arith.constant 0 : i32
    return %c0_i32, %c0_i32_0 : i32, i32
  }
  func.func @transform_2(%arg0: i32, %arg1: i32) -> (i32, i32) {
    %c0_i32 = arith.constant 0 : i32
    %c0_i32_0 = arith.constant 0 : i32
    %c0_i32_1 = arith.constant 0 : i32
    return %c0_i32, %c0_i32_0 : i32, i32
  }
  func.func @transform_3(%arg0: i32, %arg1: i32) -> (i32, i32, i32, i32, i32) {
    %c0_i32 = arith.constant 0 : i32
    %c0_i32_0 = arith.constant 0 : i32
    %c0_i32_1 = arith.constant 0 : i32
    %c0_i32_2 = arith.constant 0 : i32
    return %arg0, %arg1, %c0_i32, %c0_i32_0, %c0_i32_1 : i32, i32, i32, i32, i32
  }
}

</mosaic_0001>

<llo_original>
// kernel: tpu_custom_call.1
$region0: #{tpu_custom_call.1}
  #allocation0 [shape = 'u32[]', space=smem, size = 0x4, offset = 0x4, fixed_abs, tag = 'smem constant byte address 0x4 - core index']
  #allocation1 [shape = 'u32[72,128]{1,0:T(1,128)}', space=vmem, size = 0x9000, scoped, tag = 'internal scratch']
  #allocation2 [shape = 'f32[4,8,17,128]{3,2,1,0:T(8,128)}', space=vmem, size = 0x60000, scoped, tag = 'scratch operand']
  #allocation3 [shape = 's32[4]{0}', space=sflag, size = 0x10, scoped, tag = 'scratch operand']
  #allocation8 [shape = 's32[]', space=sflag, size = 0x4, offset = 0, fixed_abs, tag = 'sflag constant byte address 0x0 - dummy sync flag']
  #allocation9 [shape = 's32[]', space=sflag, size = 0x4, offset = 0, fixed_abs, tag = 'sflag constant byte address 0x0 - dummy sync flag']
  #allocation10 [shape = 's32[]', space=sflag, size = 0x4, offset = 0, fixed_abs, tag = 'sflag constant byte address 0x0 - dummy sync flag']
  %s0 = inlined_call_operand.hbm [shape: f32[2,8,6,8,128], index: 0, kind: input, shape index: {}]
  %s1 = inlined_call_operand.hbm [shape: f32[27,128], index: 1, kind: input, shape index: {}]
  %s2 = inlined_call_operand.vmem [shape: f32[1,128], index: 2, kind: input, shape index: {}]
  %s3 = inlined_call_operand.hbm [shape: f32[2,8,6,8,128], index: 3, kind: output, shape index: {}]
  %s4 = sld [smem:[#allocation0]]
  $region57: #{tpu_custom_call.1} parent=0
    _
  %s6 = ssub.s32 1, %s4
  %s7 = scalar_select 0, %s6, %s4
  $region1: #{tpu_custom_call.1} parent=0
    #allocation4 [shape = 'u8[16384]{0}', space=vmem, size = 0x4000, scoped, tag = 'input window, operand 1, single buffered']
    #allocation5 [shape = 's32[2]{0}', space=sflag, size = 0x8, scoped, tag = 'scoped memory for tpu_custom_call.1']
    #allocation6 [shape = 's32[2]{0}', space=sflag, size = 0x8, scoped, tag = 'scoped memory for tpu_custom_call.1']
    #allocation7 [shape = 'u8[49152]{0}', space=vmem, size = 0xc000, scoped, tag = 'output window, operand 0']
    %8 = vsyncpa [#allocation5], 0
    %9 = vsyncpa [#allocation6], 0
    %s10 = scalar_lea.sflag [#allocation6], 1
    %11 = vsyncpa %s10, 0
    loop: start=0, step=1, limit=18
    $region2: #{tpu_custom_call.1} parent=1 // loop_pre_header
      _
    $region3: #{tpu_custom_call.1} parent=1 // loop_header
      %s13 = sphi 0, %s17
      %p14 = scmp.ge.s32.totalorder %s13, 18
      %s20 = sphi 0, %s32
      %s21 = sphi 0, %s28
      %s22 = sphi 0, %s20
      %s23 = sphi 0, %s21
      %s24 = sphi 0, %s22
      %s25 = sphi 0, %s23
      %s33 = sphi 0, %s33
      %s35 = sphi 0, %s33
      %s36 = sphi 0, %s35
      %s50 = sphi 0, %s36
      %s54 = sphi 0, %s54
      %s56 = sphi 0, %s54
      %s57 = sphi 0, %s56
      %s71 = sphi 0, %s57
      %s79 = sphi 0, %s81
      %s82 = sphi 0, %s79
      %s83 = sphi 0, %s82
      %s99 = sphi 0, %s83
    $region4: #{tpu_custom_call.1} parent=1 // loop_header_branch
      %16 = sbr.rel (%p14) target = $region8
    $region5: #{tpu_custom_call.1} parent=1 // loop_body
      %s18 = ssub.s32 %s13, 1
      %s19 = ssub.s32 %s13, 2
      %s26 = sadd.s32 1, %s21
      %p27 = scmp.ge.s32.totalorder %s26, 8
      %s28 = scalar_select %p27, 0, %s26
      %s29 = sadd.s32 1, %s20
      %s30 = scalar_select %p27, %s29, %s20
      %p31 = scmp.ge.s32.totalorder %s30, 2
      %s32 = scalar_select %p31, 0, %s30
      %s34 = sadd.s32 %s33, 1
      %p37 = scmp.eq.s32.totalorder %s13, 15
      %p38 = scmp.ne.s32.totalorder %s33, %s35
      %p39 = scmp.eq.s32.totalorder %s13, 0
      %p40 = por %p38, %p39
      %p41 = scmp.ne.s32.totalorder %s33, %s35
      %p42 = scmp.eq.s32.totalorder %s18, 15
      %p43 = por %p41, %p42
      %p44 = scmp.ne.s32.totalorder %s35, %s36
      %p45 = scmp.eq.s32.totalorder %s18, 0
      %p46 = por %p44, %p45
      %p47 = scmp.ne.s32.totalorder %s35, %s36
      %p48 = scmp.eq.s32.totalorder %s19, 15
      %p49 = por %p47, %p48
      %p51 = scmp.ne.s32.totalorder %s36, %s50
      %p52 = scmp.eq.s32.totalorder %s19, 0
      %p53 = por %p51, %p52
      %s55 = sadd.s32 %s54, 1
      %p58 = scmp.eq.s32.totalorder %s13, 15
      %p59 = scmp.ne.s32.totalorder %s54, %s56
      %p60 = scmp.eq.s32.totalorder %s13, 0
      %p61 = por %p59, %p60
      %p62 = scmp.ne.s32.totalorder %s54, %s56
      %p63 = scmp.eq.s32.totalorder %s18, 15
      %p64 = por %p62, %p63
      %p65 = scmp.ne.s32.totalorder %s56, %s57
      %p66 = scmp.eq.s32.totalorder %s18, 0
      %p67 = por %p65, %p66
      %p68 = scmp.ne.s32.totalorder %s56, %s57
      %p69 = scmp.eq.s32.totalorder %s19, 15
      %p70 = por %p68, %p69
      %p72 = scmp.ne.s32.totalorder %s57, %s71
      %p73 = scmp.eq.s32.totalorder %s19, 0
      %p74 = por %p72, %p73
      %s75 = ssub.s32 %s20, %s32
      %s76 = ssub.s32 %s21, %s28
      %s77 = sor.u32 %s75, %s76
      %p78 = scmp.eq.s32.totalorder %s77, 0
      %s80 = sadd.s32 %s79, 1
      %s81 = scalar_select %p78, %s79, %s80
      %p84 = pneg %p78
      %p85 = scmp.eq.s32.totalorder %s13, 15
      %p86 = por %p84, %p85
      %p87 = scmp.ne.s32.totalorder %s79, %s82
      %p88 = scmp.eq.s32.totalorder %s13, 0
      %p89 = por %p87, %p88
      %p90 = scmp.ne.s32.totalorder %s79, %s82
      %p91 = scmp.eq.s32.totalorder %s18, 15
      %p92 = por %p90, %p91
      %p93 = scmp.ne.s32.totalorder %s82, %s83
      %p94 = scmp.eq.s32.totalorder %s18, 0
      %p95 = por %p93, %p94
      %p96 = scmp.ne.s32.totalorder %s82, %s83
      %p97 = scmp.eq.s32.totalorder %s19, 15
      %p98 = por %p96, %p97
      %p100 = scmp.ne.s32.totalorder %s83, %s99
      %p101 = scmp.eq.s32.totalorder %s19, 0
      %p102 = por %p100, %p101
      %p103 = scmp.le.s32.totalorder 1, %s13
      %p104 = scmp.lt.s32.totalorder %s13, 17
      %p105 = pnand %p103, %p104
      %p106 = pneg %p105
      // Predicated region
      $region9: #{tpu_custom_call.1} parent=5 // pred_check
        _
      $region10: #{tpu_custom_call.1} parent=5 // pred_check_branch
        %108 = sbr.rel (%p105) target = $region12
      $region11: #{tpu_custom_call.1} parent=5 // pred_region
        %s109 = ssub.s32 %s13, 1
        // Predicated region
        $region13: #{tpu_custom_call.1} parent=11 // pred_check
          %p110 = pneg %p46
        $region14: #{tpu_custom_call.1} parent=11 // pred_check_branch
          %112 = sbr.rel (%p110) target = $region16
        $region15: #{tpu_custom_call.1} parent=11 // pred_region
          %114 = vsyncadd [#allocation5], 0
          %s115 = sshll.u32 %s1, 4
          %s116 = int_to_ptr.hbm [resolvable:$true] %s115
          %s117 = sshll.u32 [#allocation4], 4
          %s118 = int_to_ptr.vmem [resolvable:$true] %s117
          %123 = dma.hbm_to_vmem [thread:$0]  %s116, 512, %s118, [#allocation5], 128, 128, 8
        $region16: #{tpu_custom_call.1} parent=11 // pred_fallthru
          _
        // Predicated region
        $region17: #{tpu_custom_call.1} parent=11 // pred_check
          %p124 = pneg %p67
        $region18: #{tpu_custom_call.1} parent=11 // pred_check_branch
          %126 = sbr.rel (%p124) target = $region20
        $region19: #{tpu_custom_call.1} parent=11 // pred_region
          _
        $region20: #{tpu_custom_call.1} parent=11 // pred_fallthru
          _
      $region12: #{tpu_custom_call.1} parent=5 // pred_fallthru
        _
      %p127 = scmp.lt.s32.totalorder %s13, 16
      // Predicated region
      $region21: #{tpu_custom_call.1} parent=5 // pred_check
        %p128 = pneg %p127
      $region22: #{tpu_custom_call.1} parent=5 // pred_check_branch
        %130 = sbr.rel (%p128) target = $region24
      $region23: #{tpu_custom_call.1} parent=5 // pred_region
        _
      $region24: #{tpu_custom_call.1} parent=5 // pred_fallthru
        _
      %p131 = scmp.le.s32.totalorder 1, %s13
      %p132 = scmp.lt.s32.totalorder %s13, 17
      %p133 = pnand %p131, %p132
      %p134 = pneg %p133
      // Predicated region
      $region25: #{tpu_custom_call.1} parent=5 // pred_check
        _
      $region26: #{tpu_custom_call.1} parent=5 // pred_check_branch
        %136 = sbr.rel (%p133) target = $region28
      $region27: #{tpu_custom_call.1} parent=5 // pred_region
        %s137 = ssub.s32 %s13, 1
        // Predicated region
        $region29: #{tpu_custom_call.1} parent=27 // pred_check
          %p138 = pneg %p46
        $region30: #{tpu_custom_call.1} parent=27 // pred_check_branch
          %140 = sbr.rel (%p138) target = $region32
        $region31: #{tpu_custom_call.1} parent=27 // pred_region
          %142 = dma.done [#allocation5], 512
        $region32: #{tpu_custom_call.1} parent=27 // pred_fallthru
          _
        %p143 = pneg %p46
        %p144 = pneg %p43
        %p145 = pneg %p67
        %p146 = pneg %p64
        %p147 = pneg %p95
        %p148 = pneg %p92
        %s149 = sand.u32 %s82, 1
        %s150 = scalar_lea.sflag [#allocation6], %s149
        %s151 = sand.u32 %s82, 1
        %s152 = smul.addr %s151, 48
        %s153 = scalar_lea.vmem [#allocation7], %s152
        %p154 = scmp.eq.s32.totalorder %s23, 0
        // Predicated region
        $region33: #{tpu_custom_call.1} parent=27 // pred_check
          %p155 = pneg %p154
        $region34: #{tpu_custom_call.1} parent=27 // pred_check_branch
          %157 = sbr.rel (%p155) target = $region36
        $region35: #{tpu_custom_call.1} parent=27 // pred_region
          %158 = vst [vmem:[#allocation2] sm:$0xff] 0.0
          %159 = vst [vmem:[#allocation2 + $0x8] sm:$0xff] 0.0
          %160 = vst [vmem:[#allocation2 + $0x10] sm:$0x1] 0.0
          %161 = vst [vmem:[#allocation2 + $0x18] sm:$0xff] 0.0
          %162 = vst [vmem:[#allocation2 + $0x20] sm:$0xff] 0.0
          %163 = vst [vmem:[#allocation2 + $0x28] sm:$0x1] 0.0
          %164 = vst [vmem:[#allocation2 + $0x30] sm:$0xff] 0.0
          %165 = vst [vmem:[#allocation2 + $0x38] sm:$0xff] 0.0
          %166 = vst [vmem:[#allocation2 + $0x40] sm:$0x1] 0.0
          %167 = vst [vmem:[#allocation2 + $0x48] sm:$0xff] 0.0
          %168 = vst [vmem:[#allocation2 + $0x50] sm:$0xff] 0.0
          %169 = vst [vmem:[#allocation2 + $0x58] sm:$0x1] 0.0
          %170 = vst [vmem:[#allocation2 + $0x60] sm:$0xff] 0.0
          %171 = vst [vmem:[#allocation2 + $0x68] sm:$0xff] 0.0
          %172 = vst [vmem:[#allocation2 + $0x70] sm:$0x1] 0.0
          %173 = vst [vmem:[#allocation2 + $0x78] sm:$0xff] 0.0
          %174 = vst [vmem:[#allocation2 + $0x80] sm:$0xff] 0.0
          %175 = vst [vmem:[#allocation2 + $0x88] sm:$0x1] 0.0
          %176 = vst [vmem:[#allocation2 + $0x90] sm:$0xff] 0.0
          %177 = vst [vmem:[#allocation2 + $0x98] sm:$0xff] 0.0
          %178 = vst [vmem:[#allocation2 + $0xa0] sm:$0x1] 0.0
          %179 = vst [vmem:[#allocation2 + $0xa8] sm:$0xff] 0.0
          %180 = vst [vmem:[#allocation2 + $0xb0] sm:$0xff] 0.0
          %181 = vst [vmem:[#allocation2 + $0xb8] sm:$0x1] 0.0
          %182 = vst [vmem:[#allocation2 + $0xc0] sm:$0xff] 0.0
          %183 = vst [vmem:[#allocation2 + $0xc8] sm:$0xff] 0.0
          %184 = vst [vmem:[#allocation2 + $0xd0] sm:$0x1] 0.0
          %185 = vst [vmem:[#allocation2 + $0xd8] sm:$0xff] 0.0
          %186 = vst [vmem:[#allocation2 + $0xe0] sm:$0xff] 0.0
          %187 = vst [vmem:[#allocation2 + $0xe8] sm:$0x1] 0.0
          %188 = vst [vmem:[#allocation2 + $0xf0] sm:$0xff] 0.0
          %189 = vst [vmem:[#allocation2 + $0xf8] sm:$0xff] 0.0
          %190 = vst [vmem:[#allocation2 + $0x100] sm:$0x1] 0.0
          %191 = vst [vmem:[#allocation2 + $0x108] sm:$0xff] 0.0
          %192 = vst [vmem:[#allocation2 + $0x110] sm:$0xff] 0.0
          %193 = vst [vmem:[#allocation2 + $0x118] sm:$0x1] 0.0
          %194 = vst [vmem:[#allocation2 + $0x120] sm:$0xff] 0.0
          %195 = vst [vmem:[#allocation2 + $0x128] sm:$0xff] 0.0
          %196 = vst [vmem:[#allocation2 + $0x130] sm:$0x1] 0.0
          %197 = vst [vmem:[#allocation2 + $0x138] sm:$0xff] 0.0
          %198 = vst [vmem:[#allocation2 + $0x140] sm:$0xff] 0.0
          %199 = vst [vmem:[#allocation2 + $0x148] sm:$0x1] 0.0
          %200 = vst [vmem:[#allocation2 + $0x150] sm:$0xff] 0.0
          %201 = vst [vmem:[#allocation2 + $0x158] sm:$0xff] 0.0
          %202 = vst [vmem:[#allocation2 + $0x160] sm:$0x1] 0.0
          %203 = vst [vmem:[#allocation2 + $0x168] sm:$0xff] 0.0
          %204 = vst [vmem:[#allocation2 + $0x170] sm:$0xff] 0.0
          %205 = vst [vmem:[#allocation2 + $0x178] sm:$0x1] 0.0
          %206 = vst [vmem:[#allocation2 + $0x180] sm:$0xff] 0.0
          %207 = vst [vmem:[#allocation2 + $0x188] sm:$0xff] 0.0
          %208 = vst [vmem:[#allocation2 + $0x190] sm:$0x1] 0.0
          %209 = vst [vmem:[#allocation2 + $0x198] sm:$0xff] 0.0
          %210 = vst [vmem:[#allocation2 + $0x1a0] sm:$0xff] 0.0
          %211 = vst [vmem:[#allocation2 + $0x1a8] sm:$0x1] 0.0
          %212 = vst [vmem:[#allocation2 + $0x1b0] sm:$0xff] 0.0
          %213 = vst [vmem:[#allocation2 + $0x1b8] sm:$0xff] 0.0
          %214 = vst [vmem:[#allocation2 + $0x1c0] sm:$0x1] 0.0
          %215 = vst [vmem:[#allocation2 + $0x1c8] sm:$0xff] 0.0
          %216 = vst [vmem:[#allocation2 + $0x1d0] sm:$0xff] 0.0
          %217 = vst [vmem:[#allocation2 + $0x1d8] sm:$0x1] 0.0
          %218 = vst [vmem:[#allocation2 + $0x1e0] sm:$0xff] 0.0
          %219 = vst [vmem:[#allocation2 + $0x1e8] sm:$0xff] 0.0
          %220 = vst [vmem:[#allocation2 + $0x1f0] sm:$0x1] 0.0
          %221 = vst [vmem:[#allocation2 + $0x1f8] sm:$0xff] 0.0
          %222 = vst [vmem:[#allocation2 + $0x200] sm:$0xff] 0.0
          %223 = vst [vmem:[#allocation2 + $0x208] sm:$0x1] 0.0
          %224 = vst [vmem:[#allocation2 + $0x210] sm:$0xff] 0.0
          %225 = vst [vmem:[#allocation2 + $0x218] sm:$0xff] 0.0
          %226 = vst [vmem:[#allocation2 + $0x220] sm:$0x1] 0.0
          %227 = vst [vmem:[#allocation2 + $0x228] sm:$0xff] 0.0
          %228 = vst [vmem:[#allocation2 + $0x230] sm:$0xff] 0.0
          %229 = vst [vmem:[#allocation2 + $0x238] sm:$0x1] 0.0
          %230 = vst [vmem:[#allocation2 + $0x240] sm:$0xff] 0.0
          %231 = vst [vmem:[#allocation2 + $0x248] sm:$0xff] 0.0
          %232 = vst [vmem:[#allocation2 + $0x250] sm:$0x1] 0.0
          %233 = vst [vmem:[#allocation2 + $0x258] sm:$0xff] 0.0
          %234 = vst [vmem:[#allocation2 + $0x260] sm:$0xff] 0.0
          %235 = vst [vmem:[#allocation2 + $0x268] sm:$0x1] 0.0
          %236 = vst [vmem:[#allocation2 + $0x270] sm:$0xff] 0.0
          %237 = vst [vmem:[#allocation2 + $0x278] sm:$0xff] 0.0
          %238 = vst [vmem:[#allocation2 + $0x280] sm:$0x1] 0.0
          %239 = vst [vmem:[#allocation2 + $0x288] sm:$0xff] 0.0
          %240 = vst [vmem:[#allocation2 + $0x290] sm:$0xff] 0.0
          %241 = vst [vmem:[#allocation2 + $0x298] sm:$0x1] 0.0
          %242 = vst [vmem:[#allocation2 + $0x2a0] sm:$0xff] 0.0
          %243 = vst [vmem:[#allocation2 + $0x2a8] sm:$0xff] 0.0
          %244 = vst [vmem:[#allocation2 + $0x2b0] sm:$0x1] 0.0
          %245 = vst [vmem:[#allocation2 + $0x2b8] sm:$0xff] 0.0
          %246 = vst [vmem:[#allocation2 + $0x2c0] sm:$0xff] 0.0
          %247 = vst [vmem:[#allocation2 + $0x2c8] sm:$0x1] 0.0
          %248 = vst [vmem:[#allocation2 + $0x2d0] sm:$0xff] 0.0
          %249 = vst [vmem:[#allocation2 + $0x2d8] sm:$0xff] 0.0
          %250 = vst [vmem:[#allocation2 + $0x2e0] sm:$0x1] 0.0
          %251 = vst [vmem:[#allocation2 + $0x2e8] sm:$0xff] 0.0
          %252 = vst [vmem:[#allocation2 + $0x2f0] sm:$0xff] 0.0
          %253 = vst [vmem:[#allocation2 + $0x2f8] sm:$0x1] 0.0
          %s254 = smul.u32 %s22, 384
          %s255 = scalar_lea.hbm %s0, %s254
          %s256 = scalar_lea.vmem [#allocation2], 32
          %s257 = sshll.u32 %s255, 4
          %s258 = int_to_ptr.hbm [resolvable:$true] %s257
          %s259 = sshll.u32 %s256, 4
          %s260 = int_to_ptr.vmem [resolvable:$true] %s259
          %264 = dma.hbm_to_vmem [thread:$0]  %s258, 768, %s260, [#allocation3], 128, 384, 8
          %s265 = sadd.s32 48, %s254
          %s266 = scalar_lea.hbm %s0, %s265
          %s267 = scalar_lea.vmem [#allocation2], 224
          %s268 = scalar_lea.sflag [#allocation3], 1
          %s269 = sshll.u32 %s266, 4
          %s270 = int_to_ptr.hbm [resolvable:$true] %s269
          %s271 = sshll.u32 %s267, 4
          %s272 = int_to_ptr.vmem [resolvable:$true] %s271
          %276 = dma.hbm_to_vmem [thread:$0]  %s270, 768, %s272, %s268, 128, 384, 8
          %s277 = smul.u32 6, 8
          %s278 = smul.u32 %s277, 1
          %s279 = sshll.u32 %s278, 4
          %280 = dma.done [#allocation3], %s279
        $region36: #{tpu_custom_call.1} parent=27 // pred_fallthru
          _
        %s281 = sadd.s32 %s23, 1
        %p282 = scmp.le.s32.totalorder %s281, 7
        // Predicated region
        $region37: #{tpu_custom_call.1} parent=27 // pred_check
          %p283 = pneg %p282
        $region38: #{tpu_custom_call.1} parent=27 // pred_check_branch
          %285 = sbr.rel (%p283) target = $region40
        $region39: #{tpu_custom_call.1} parent=27 // pred_region
          %p286 = scmp.lt.s32.totalorder %s281, 0
          %s287 = ssub.s32 0, %s281
          %s288 = scalar_select %p286, %s287, %s281
          %s289 = sand.u32 %s288, 3
          %s290 = ssub.s32 0, %s289
          %s291 = scalar_select %p286, %s290, %s289
          %p292 = scmp.ne.s32.totalorder %s291, 0
          %p293 = scmp.lt.s32.totalorder %s291, 0
          %p294 = pnand %p293, %p292
          %p295 = pneg %p294
          %s296 = sadd.s32 %s291, 4
          %s297 = scalar_select %p295, %s296, %s291
          %s298 = scalar_lea.sflag [#allocation3], %s297
          %s299 = smul.u32 6, 8
          %s300 = smul.u32 %s299, 1
          %s301 = sshll.u32 %s300, 4
          %302 = dma.done %s298, %s301
        $region40: #{tpu_custom_call.1} parent=27 // pred_fallthru
          _
        %s303 = sadd.s32 %s23, 2
        %p304 = scmp.le.s32.totalorder %s303, 7
        // Predicated region
        $region41: #{tpu_custom_call.1} parent=27 // pred_check
          %p305 = pneg %p304
        $region42: #{tpu_custom_call.1} parent=27 // pred_check_branch
          %307 = sbr.rel (%p305) target = $region44
        $region43: #{tpu_custom_call.1} parent=27 // pred_region
          %p308 = scmp.lt.s32.totalorder %s303, 0
          %s309 = ssub.s32 0, %s303
          %s310 = scalar_select %p308, %s309, %s303
          %s311 = sand.u32 %s310, 3
          %s312 = ssub.s32 0, %s311
          %s313 = scalar_select %p308, %s312, %s311
          %p314 = scmp.ne.s32.totalorder %s313, 0
          %p315 = scmp.lt.s32.totalorder %s313, 0
          %p316 = pnand %p315, %p314
          %p317 = pneg %p316
          %s318 = sadd.s32 %s313, 4
          %s319 = scalar_select %p317, %s318, %s313
          %s320 = smul.u32 %s303, 48
          %s321 = smul.u32 %s22, 384
          %s322 = sadd.s32 %s320, %s321
          %s323 = scalar_lea.hbm %s0, %s322
          %s324 = smul.u32 %s319, 192
          %s325 = sadd.s32 32, %s324
          %s326 = scalar_lea.vmem [#allocation2], %s325
          %s327 = scalar_lea.sflag [#allocation3], %s319
          %s328 = sshll.u32 %s323, 4
          %s329 = int_to_ptr.hbm [resolvable:$true] %s328
          %s330 = sshll.u32 %s326, 4
          %s331 = int_to_ptr.vmem [resolvable:$true] %s330
          %335 = dma.hbm_to_vmem [thread:$0]  %s329, 768, %s331, %s327, 128, 384, 8
        $region44: #{tpu_custom_call.1} parent=27 // pred_fallthru
          _
        %p336 = scmp.gt.s32.totalorder %s23, 0
        %s337 = scalar_select %p336, 1.0, 0.0
        %p338 = scmp.lt.s32.totalorder %s23, 7
        %s339 = scalar_select %p338, 1.0, 0.0
        %s340 = ssub.s32 %s23, 1
        %p341 = scmp.gt.s32.totalorder %s340, 0
        %s342 = scalar_select %p341, %s340, 0
        %p343 = scmp.lt.s32.totalorder %s342, 0
        %s344 = ssub.s32 0, %s342
        %s345 = scalar_select %p343, %s344, %s342
        %s346 = sand.u32 %s345, 3
        %s347 = ssub.s32 0, %s346
        %s348 = scalar_select %p343, %s347, %s346
        %p349 = scmp.ne.s32.totalorder %s348, 0
        %p350 = scmp.lt.s32.totalorder %s348, 0
        %p351 = pnand %p350, %p349
        %p352 = pneg %p351
        %s353 = sadd.s32 %s348, 4
        %s354 = scalar_select %p352, %s353, %s348
        %p355 = scmp.lt.s32.totalorder %s23, 0
        %s356 = ssub.s32 0, %s23
        %s357 = scalar_select %p355, %s356, %s23
        %s358 = sand.u32 %s357, 3
        %s359 = ssub.s32 0, %s358
        %s360 = scalar_select %p355, %s359, %s358
        %p361 = scmp.ne.s32.totalorder %s360, 0
        %p362 = scmp.lt.s32.totalorder %s360, 0
        %p363 = pnand %p362, %p361
        %p364 = pneg %p363
        %s365 = sadd.s32 %s360, 4
        %s366 = scalar_select %p364, %s365, %s360
        %p367 = scmp.lt.s32.totalorder %s281, 7
        %s368 = scalar_select %p367, %s281, 7
        %p369 = scmp.lt.s32.totalorder %s368, 0
        %s370 = ssub.s32 0, %s368
        %s371 = scalar_select %p369, %s370, %s368
        %s372 = sand.u32 %s371, 3
        %s373 = ssub.s32 0, %s372
        %s374 = scalar_select %p369, %s373, %s372
        %p375 = scmp.ne.s32.totalorder %s374, 0
        %p376 = scmp.lt.s32.totalorder %s374, 0
        %p377 = pnand %p376, %p375
        %p378 = pneg %p377
        %s379 = sadd.s32 %s374, 4
        %s380 = scalar_select %p378, %s379, %s374
        %v381 = vld [vmem:[#allocation4] sm:$0x1]
        %v382 = vstv %s337
        %v383 = vmul.f32 %v381, %v382
        %v384 = vld [vmem:[#allocation4 + $0x1] sm:$0x1]
        %v385 = vmul.f32 %v384, %v382
        %v386 = vld [vmem:[#allocation4 + $0x2] sm:$0x1]
        %v387 = vmul.f32 %v386, %v382
        %v388 = vld [vmem:[#allocation4 + $0x3] sm:$0x1]
        %v389 = vmul.f32 %v388, %v382
        %v390 = vld [vmem:[#allocation4 + $0x4] sm:$0x1]
        %v391 = vmul.f32 %v390, %v382
        %v392 = vld [vmem:[#allocation4 + $0x5] sm:$0x1]
        %v393 = vmul.f32 %v392, %v382
        %v394 = vld [vmem:[#allocation4 + $0x6] sm:$0x1]
        %v395 = vmul.f32 %v394, %v382
        %v396 = vld [vmem:[#allocation4 + $0x7] sm:$0x1]
        %v397 = vmul.f32 %v396, %v382
        %v398 = vld [vmem:[#allocation4 + $0x8] sm:$0x1]
        %v399 = vmul.f32 %v398, %v382
        %v400 = vld [vmem:[#allocation4 + $0x9] sm:$0x1]
        %v401 = vld [vmem:[#allocation4 + $0xa] sm:$0x1]
        %v402 = vld [vmem:[#allocation4 + $0xb] sm:$0x1]
        %v403 = vld [vmem:[#allocation4 + $0xc] sm:$0x1]
        %v404 = vld [vmem:[#allocation4 + $0xd] sm:$0x1]
        %v405 = vld [vmem:[#allocation4 + $0xe] sm:$0x1]
        %v406 = vld [vmem:[#allocation4 + $0xf] sm:$0x1]
        %v407 = vld [vmem:[#allocation4 + $0x10] sm:$0x1]
        %v408 = vld [vmem:[#allocation4 + $0x11] sm:$0x1]
        %v409 = vld [vmem:[#allocation4 + $0x12] sm:$0x1]
        %v410 = vstv %s339
        %v411 = vmul.f32 %v409, %v410
        %v412 = vld [vmem:[#allocation4 + $0x13] sm:$0x1]
        %v413 = vmul.f32 %v412, %v410
        %v414 = vld [vmem:[#allocation4 + $0x14] sm:$0x1]
        %v415 = vmul.f32 %v414, %v410
        %v416 = vld [vmem:[#allocation4 + $0x15] sm:$0x1]
        %v417 = vmul.f32 %v416, %v410
        %v418 = vld [vmem:[#allocation4 + $0x16] sm:$0x1]
        %v419 = vmul.f32 %v418, %v410
        %v420 = vld [vmem:[#allocation4 + $0x17] sm:$0x1]
        %v421 = vmul.f32 %v420, %v410
        %v422 = vld [vmem:[#allocation4 + $0x18] sm:$0x1]
        %v423 = vmul.f32 %v422, %v410
        %v424 = vld [vmem:[#allocation4 + $0x19] sm:$0x1]
        %v425 = vmul.f32 %v424, %v410
        %v426 = vld [vmem:[#allocation4 + $0x1a] sm:$0x1]
        %v427 = vmul.f32 %v426, %v410
        %v428 = vld [vmem:[%s2] sm:$0x1]
        %s429 = smul.u32 %s354, 192
        %s430 = scalar_lea.vmem [#allocation2], %s429
        %v431 = vld [vmem:[%s430] sm:$0xff]
        %v432 = vld [vmem:[%s430 + $0x8] sm:$0xff]
        %v433 = vld [vmem:[%s430 + $0x10] sm:$0x1]
        %v434 = vld [vmem:[%s430 + $0x18] sm:$0xff]
        %v435 = vld [vmem:[%s430 + $0x20] sm:$0xff]
        %v436 = vld [vmem:[%s430 + $0x28] sm:$0x1]
        %v437 = vld [vmem:[%s430 + $0x30] sm:$0xff]
        %v438 = vld [vmem:[%s430 + $0x38] sm:$0xff]
        %v439 = vld [vmem:[%s430 + $0x40] sm:$0x1]
        %v440 = vld [vmem:[%s430 + $0x48] sm:$0xff]
        %v441 = vld [vmem:[%s430 + $0x50] sm:$0xff]
        %v442 = vld [vmem:[%s430 + $0x58] sm:$0x1]
        %v443 = vld [vmem:[%s430 + $0x60] sm:$0xff]
        %v444 = vld [vmem:[%s430 + $0x68] sm:$0xff]
        %v445 = vld [vmem:[%s430 + $0x70] sm:$0x1]
        %v446 = vld [vmem:[%s430 + $0x78] sm:$0xff]
        %v447 = vld [vmem:[%s430 + $0x80] sm:$0xff]
        %v448 = vld [vmem:[%s430 + $0x88] sm:$0x1]
        %v449 = vperm.slane %v383, 0
        %v450 = vmul.f32 %v431, %v449
        %v451 = vmul.f32 %v432, %v449
        %v452 = vmul.f32 %v434, %v449
        %v453 = vmul.f32 %v435, %v449
        %v454 = vmul.f32 %v437, %v449
        %v455 = vmul.f32 %v438, %v449
        %v456 = vmul.f32 %v440, %v449
        %v457 = vmul.f32 %v441, %v449
        %v458 = vperm.slane %v389, 0
        %v459 = vmul.f32 %v434, %v458
        %v460 = vmul.f32 %v435, %v458
        %v461 = vmul.f32 %v437, %v458
        %v462 = vmul.f32 %v438, %v458
        %v463 = vmul.f32 %v440, %v458
        %v464 = vmul.f32 %v441, %v458
        %v465 = vmul.f32 %v443, %v458
        %v466 = vmul.f32 %v444, %v458
        %v467 = vadd.f32 %v450, %v459
        %v468 = vadd.f32 %v451, %v460
        %v469 = vadd.f32 %v452, %v461
        %v470 = vadd.f32 %v453, %v462
        %v471 = vadd.f32 %v454, %v463
        %v472 = vadd.f32 %v455, %v464
        %v473 = vadd.f32 %v456, %v465
        %v474 = vadd.f32 %v457, %v466
        %v475 = vperm.slane %v395, 0
        %v476 = vmul.f32 %v437, %v475
        %v477 = vmul.f32 %v438, %v475
        %v478 = vmul.f32 %v440, %v475
        %v479 = vmul.f32 %v441, %v475
        %v480 = vmul.f32 %v443, %v475
        %v481 = vmul.f32 %v444, %v475
        %v482 = vmul.f32 %v446, %v475
        %v483 = vmul.f32 %v447, %v475
        %v484 = vadd.f32 %v467, %v476
        %v485 = vadd.f32 %v468, %v477
        %v486 = vadd.f32 %v469, %v478
        %v487 = vadd.f32 %v470, %v479
        %v488 = vadd.f32 %v471, %v480
        %v489 = vadd.f32 %v472, %v481
        %v490 = vadd.f32 %v473, %v482
        %v491 = vadd.f32 %v474, %v483
        %v492 = vperm.slane %v385, 0
        %v493 = vmul.f32 %v432, %v492
        %v494 = vmul.f32 %v435, %v492
        %v495 = vmul.f32 %v438, %v492
        %v496 = vmul.f32 %v441, %v492
        %v501 = vrot.slane %v493, 1
        %v502 = vrot.slane %v494, 1
        %v503 = vrot.slane %v495, 1
        %v504 = vrot.slane %v496, 1
        %v509 = vadd.f32 %v484, %v501
        %v510 = vadd.f32 %v485, %v501
        %v511 = vadd.f32 %v486, %v502
        %v512 = vadd.f32 %v487, %v502
        %v513 = vadd.f32 %v488, %v503
        %v514 = vadd.f32 %v489, %v503
        %v515 = vadd.f32 %v490, %v504
        %v516 = vadd.f32 %v491, %v504
        %v517 = vperm.slane %v391, 0
        %v518 = vmul.f32 %v435, %v517
        %v519 = vmul.f32 %v438, %v517
        %v520 = vmul.f32 %v441, %v517
        %v521 = vmul.f32 %v444, %v517
        %v526 = vrot.slane %v518, 1
        %v527 = vrot.slane %v519, 1
        %v528 = vrot.slane %v520, 1
        %v529 = vrot.slane %v521, 1
        %v534 = vadd.f32 %v509, %v526
        %v535 = vadd.f32 %v510, %v526
        %v536 = vadd.f32 %v511, %v527
        %v537 = vadd.f32 %v512, %v527
        %v538 = vadd.f32 %v513, %v528
        %v539 = vadd.f32 %v514, %v528
        %v540 = vadd.f32 %v515, %v529
        %v541 = vadd.f32 %v516, %v529
        %v542 = vperm.slane %v397, 0
        %v543 = vmul.f32 %v438, %v542
        %v544 = vmul.f32 %v441, %v542
        %v545 = vmul.f32 %v444, %v542
        %v546 = vmul.f32 %v447, %v542
        %v551 = vrot.slane %v543, 1
        %v552 = vrot.slane %v544, 1
        %v553 = vrot.slane %v545, 1
        %v554 = vrot.slane %v546, 1
        %v559 = vadd.f32 %v534, %v551
        %v560 = vadd.f32 %v535, %v551
        %v561 = vadd.f32 %v536, %v552
        %v562 = vadd.f32 %v537, %v552
        %v563 = vadd.f32 %v538, %v553
        %v564 = vadd.f32 %v539, %v553
        %v565 = vadd.f32 %v540, %v554
        %v566 = vadd.f32 %v541, %v554
        %v567 = vperm.slane %v387, 0
        %v568 = vmul.f32 %v432, %v567
        %v569 = vmul.f32 %v433, %v567
        %v570 = vmul.f32 %v435, %v567
        %v571 = vmul.f32 %v436, %v567
        %v572 = vmul.f32 %v438, %v567
        %v573 = vmul.f32 %v439, %v567
        %v574 = vmul.f32 %v441, %v567
        %v575 = vmul.f32 %v442, %v567
        %vm584 = vcmask 1045504
        %v585 = vrot.slane %v568, 2
        %v586 = vrot.slane %v569, 2
        %v587 = vsel %vm584, %v585, %v586
        %v588 = vrot.slane %v570, 2
        %v589 = vrot.slane %v571, 2
        %v590 = vsel %vm584, %v588, %v589
        %v591 = vrot.slane %v572, 2
        %v592 = vrot.slane %v573, 2
        %v593 = vsel %vm584, %v591, %v592
        %v594 = vrot.slane %v574, 2
        %v595 = vrot.slane %v575, 2
        %v596 = vsel %vm584, %v594, %v595
        %v605 = vadd.f32 %v559, %v585
        %v606 = vadd.f32 %v560, %v587
        %v607 = vadd.f32 %v561, %v588
        %v608 = vadd.f32 %v562, %v590
        %v609 = vadd.f32 %v563, %v591
        %v610 = vadd.f32 %v564, %v593
        %v611 = vadd.f32 %v565, %v594
        %v612 = vadd.f32 %v566, %v596
        %v613 = vperm.slane %v393, 0
        %v614 = vmul.f32 %v435, %v613
        %v615 = vmul.f32 %v436, %v613
        %v616 = vmul.f32 %v438, %v613
        %v617 = vmul.f32 %v439, %v613
        %v618 = vmul.f32 %v441, %v613
        %v619 = vmul.f32 %v442, %v613
        %v620 = vmul.f32 %v444, %v613
        %v621 = vmul.f32 %v445, %v613
        %v630 = vrot.slane %v614, 2
        %v631 = vrot.slane %v615, 2
        %v632 = vsel %vm584, %v630, %v631
        %v633 = vrot.slane %v616, 2
        %v634 = vrot.slane %v617, 2
        %v635 = vsel %vm584, %v633, %v634
        %v636 = vrot.slane %v618, 2
        %v637 = vrot.slane %v619, 2
        %v638 = vsel %vm584, %v636, %v637
        %v639 = vrot.slane %v620, 2
        %v640 = vrot.slane %v621, 2
        %v641 = vsel %vm584, %v639, %v640
        %v650 = vadd.f32 %v605, %v630
        %v651 = vadd.f32 %v606, %v632
        %v652 = vadd.f32 %v607, %v633
        %v653 = vadd.f32 %v608, %v635
        %v654 = vadd.f32 %v609, %v636
        %v655 = vadd.f32 %v610, %v638
        %v656 = vadd.f32 %v611, %v639
        %v657 = vadd.f32 %v612, %v641
        %v658 = vperm.slane %v399, 0
        %v659 = vmul.f32 %v438, %v658
        %v660 = vmul.f32 %v439, %v658
        %v661 = vmul.f32 %v441, %v658
        %v662 = vmul.f32 %v442, %v658
        %v663 = vmul.f32 %v444, %v658
        %v664 = vmul.f32 %v445, %v658
        %v665 = vmul.f32 %v447, %v658
        %v666 = vmul.f32 %v448, %v658
        %v675 = vrot.slane %v659, 2
        %v676 = vrot.slane %v660, 2
        %v677 = vsel %vm584, %v675, %v676
        %v678 = vrot.slane %v661, 2
        %v679 = vrot.slane %v662, 2
        %v680 = vsel %vm584, %v678, %v679
        %v681 = vrot.slane %v663, 2
        %v682 = vrot.slane %v664, 2
        %v683 = vsel %vm584, %v681, %v682
        %v684 = vrot.slane %v665, 2
        %v685 = vrot.slane %v666, 2
        %v686 = vsel %vm584, %v684, %v685
        %v695 = vadd.f32 %v650, %v675
        %v696 = vadd.f32 %v651, %v677
        %v697 = vadd.f32 %v652, %v678
        %v698 = vadd.f32 %v653, %v680
        %v699 = vadd.f32 %v654, %v681
        %v700 = vadd.f32 %v655, %v683
        %v701 = vadd.f32 %v656, %v684
        %v702 = vadd.f32 %v657, %v686
        %s703 = smul.u32 %s366, 192
        %s704 = scalar_lea.vmem [#allocation2], %s703
        %v705 = vld [vmem:[%s704] sm:$0xff]
        %v706 = vld [vmem:[%s704 + $0x8] sm:$0xff]
        %v707 = vld [vmem:[%s704 + $0x10] sm:$0x1]
        %v708 = vld [vmem:[%s704 + $0x18] sm:$0xff]
        %v709 = vld [vmem:[%s704 + $0x20] sm:$0xff]
        %v710 = vld [vmem:[%s704 + $0x28] sm:$0x1]
        %v711 = vld [vmem:[%s704 + $0x30] sm:$0xff]
        %v712 = vld [vmem:[%s704 + $0x38] sm:$0xff]
        %v713 = vld [vmem:[%s704 + $0x40] sm:$0x1]
        %v714 = vld [vmem:[%s704 + $0x48] sm:$0xff]
        %v715 = vld [vmem:[%s704 + $0x50] sm:$0xff]
        %v716 = vld [vmem:[%s704 + $0x58] sm:$0x1]
        %v717 = vld [vmem:[%s704 + $0x60] sm:$0xff]
        %v718 = vld [vmem:[%s704 + $0x68] sm:$0xff]
        %v719 = vld [vmem:[%s704 + $0x70] sm:$0x1]
        %v720 = vld [vmem:[%s704 + $0x78] sm:$0xff]
        %v721 = vld [vmem:[%s704 + $0x80] sm:$0xff]
        %v722 = vld [vmem:[%s704 + $0x88] sm:$0x1]
        %v723 = vperm.slane %v400, 0
        %v724 = vmul.f32 %v705, %v723
        %v725 = vmul.f32 %v706, %v723
        %v726 = vmul.f32 %v708, %v723
        %v727 = vmul.f32 %v709, %v723
        %v728 = vmul.f32 %v711, %v723
        %v729 = vmul.f32 %v712, %v723
        %v730 = vmul.f32 %v714, %v723
        %v731 = vmul.f32 %v715, %v723
        %v732 = vadd.f32 %v695, %v724
        %v733 = vadd.f32 %v696, %v725
        %v734 = vadd.f32 %v697, %v726
        %v735 = vadd.f32 %v698, %v727
        %v736 = vadd.f32 %v699, %v728
        %v737 = vadd.f32 %v700, %v729
        %v738 = vadd.f32 %v701, %v730
        %v739 = vadd.f32 %v702, %v731
        %v740 = vperm.slane %v403, 0
        %v741 = vmul.f32 %v708, %v740
        %v742 = vmul.f32 %v709, %v740
        %v743 = vmul.f32 %v711, %v740
        %v744 = vmul.f32 %v712, %v740
        %v745 = vmul.f32 %v714, %v740
        %v746 = vmul.f32 %v715, %v740
        %v747 = vmul.f32 %v717, %v740
        %v748 = vmul.f32 %v718, %v740
        %v749 = vadd.f32 %v732, %v741
        %v750 = vadd.f32 %v733, %v742
        %v751 = vadd.f32 %v734, %v743
        %v752 = vadd.f32 %v735, %v744
        %v753 = vadd.f32 %v736, %v745
        %v754 = vadd.f32 %v737, %v746
        %v755 = vadd.f32 %v738, %v747
        %v756 = vadd.f32 %v739, %v748
        %v757 = vperm.slane %v406, 0
        %v758 = vmul.f32 %v711, %v757
        %v759 = vmul.f32 %v712, %v757
        %v760 = vmul.f32 %v714, %v757
        %v761 = vmul.f32 %v715, %v757
        %v762 = vmul.f32 %v717, %v757
        %v763 = vmul.f32 %v718, %v757
        %v764 = vmul.f32 %v720, %v757
        %v765 = vmul.f32 %v721, %v757
        %v766 = vadd.f32 %v749, %v758
        %v767 = vadd.f32 %v750, %v759
        %v768 = vadd.f32 %v751, %v760
        %v769 = vadd.f32 %v752, %v761
        %v770 = vadd.f32 %v753, %v762
        %v771 = vadd.f32 %v754, %v763
        %v772 = vadd.f32 %v755, %v764
        %v773 = vadd.f32 %v756, %v765
        %v774 = vperm.slane %v401, 0
        %v775 = vmul.f32 %v706, %v774
        %v776 = vmul.f32 %v709, %v774
        %v777 = vmul.f32 %v712, %v774
        %v778 = vmul.f32 %v715, %v774
        %v783 = vrot.slane %v775, 1
        %v784 = vrot.slane %v776, 1
        %v785 = vrot.slane %v777, 1
        %v786 = vrot.slane %v778, 1
        %v791 = vadd.f32 %v766, %v783
        %v792 = vadd.f32 %v767, %v783
        %v793 = vadd.f32 %v768, %v784
        %v794 = vadd.f32 %v769, %v784
        %v795 = vadd.f32 %v770, %v785
        %v796 = vadd.f32 %v771, %v785
        %v797 = vadd.f32 %v772, %v786
        %v798 = vadd.f32 %v773, %v786
        %v799 = vperm.slane %v404, 0
        %v800 = vmul.f32 %v709, %v799
        %v801 = vmul.f32 %v712, %v799
        %v802 = vmul.f32 %v715, %v799
        %v803 = vmul.f32 %v718, %v799
        %v808 = vrot.slane %v800, 1
        %v809 = vrot.slane %v801, 1
        %v810 = vrot.slane %v802, 1
        %v811 = vrot.slane %v803, 1
        %v816 = vadd.f32 %v791, %v808
        %v817 = vadd.f32 %v792, %v808
        %v818 = vadd.f32 %v793, %v809
        %v819 = vadd.f32 %v794, %v809
        %v820 = vadd.f32 %v795, %v810
        %v821 = vadd.f32 %v796, %v810
        %v822 = vadd.f32 %v797, %v811
        %v823 = vadd.f32 %v798, %v811
        %v824 = vperm.slane %v407, 0
        %v825 = vmul.f32 %v712, %v824
        %v826 = vmul.f32 %v715, %v824
        %v827 = vmul.f32 %v718, %v824
        %v828 = vmul.f32 %v721, %v824
        %v833 = vrot.slane %v825, 1
        %v834 = vrot.slane %v826, 1
        %v835 = vrot.slane %v827, 1
        %v836 = vrot.slane %v828, 1
        %v841 = vadd.f32 %v816, %v833
        %v842 = vadd.f32 %v817, %v833
        %v843 = vadd.f32 %v818, %v834
        %v844 = vadd.f32 %v819, %v834
        %v845 = vadd.f32 %v820, %v835
        %v846 = vadd.f32 %v821, %v835
        %v847 = vadd.f32 %v822, %v836
        %v848 = vadd.f32 %v823, %v836
        %v849 = vperm.slane %v402, 0
        %v850 = vmul.f32 %v706, %v849
        %v851 = vmul.f32 %v707, %v849
        %v852 = vmul.f32 %v709, %v849
        %v853 = vmul.f32 %v710, %v849
        %v854 = vmul.f32 %v712, %v849
        %v855 = vmul.f32 %v713, %v849
        %v856 = vmul.f32 %v715, %v849
        %v857 = vmul.f32 %v716, %v849
        %v866 = vrot.slane %v850, 2
        %v867 = vrot.slane %v851, 2
        %v868 = vsel %vm584, %v866, %v867
        %v869 = vrot.slane %v852, 2
        %v870 = vrot.slane %v853, 2
        %v871 = vsel %vm584, %v869, %v870
        %v872 = vrot.slane %v854, 2
        %v873 = vrot.slane %v855, 2
        %v874 = vsel %vm584, %v872, %v873
        %v875 = vrot.slane %v856, 2
        %v876 = vrot.slane %v857, 2
        %v877 = vsel %vm584, %v875, %v876
        %v886 = vadd.f32 %v841, %v866
        %v887 = vadd.f32 %v842, %v868
        %v888 = vadd.f32 %v843, %v869
        %v889 = vadd.f32 %v844, %v871
        %v890 = vadd.f32 %v845, %v872
        %v891 = vadd.f32 %v846, %v874
        %v892 = vadd.f32 %v847, %v875
        %v893 = vadd.f32 %v848, %v877
        %v894 = vperm.slane %v405, 0
        %v895 = vmul.f32 %v709, %v894
        %v896 = vmul.f32 %v710, %v894
        %v897 = vmul.f32 %v712, %v894
        %v898 = vmul.f32 %v713, %v894
        %v899 = vmul.f32 %v715, %v894
        %v900 = vmul.f32 %v716, %v894
        %v901 = vmul.f32 %v718, %v894
        %v902 = vmul.f32 %v719, %v894
        %v911 = vrot.slane %v895, 2
        %v912 = vrot.slane %v896, 2
        %v913 = vsel %vm584, %v911, %v912
        %v914 = vrot.slane %v897, 2
        %v915 = vrot.slane %v898, 2
        %v916 = vsel %vm584, %v914, %v915
        %v917 = vrot.slane %v899, 2
        %v918 = vrot.slane %v900, 2
        %v919 = vsel %vm584, %v917, %v918
        %v920 = vrot.slane %v901, 2
        %v921 = vrot.slane %v902, 2
        %v922 = vsel %vm584, %v920, %v921
        %v931 = vadd.f32 %v886, %v911
        %v932 = vadd.f32 %v887, %v913
        %v933 = vadd.f32 %v888, %v914
        %v934 = vadd.f32 %v889, %v916
        %v935 = vadd.f32 %v890, %v917
        %v936 = vadd.f32 %v891, %v919
        %v937 = vadd.f32 %v892, %v920
        %v938 = vadd.f32 %v893, %v922
        %v939 = vperm.slane %v408, 0
        %v940 = vmul.f32 %v712, %v939
        %v941 = vmul.f32 %v713, %v939
        %v942 = vmul.f32 %v715, %v939
        %v943 = vmul.f32 %v716, %v939
        %v944 = vmul.f32 %v718, %v939
        %v945 = vmul.f32 %v719, %v939
        %v946 = vmul.f32 %v721, %v939
        %v947 = vmul.f32 %v722, %v939
        %v956 = vrot.slane %v940, 2
        %v957 = vrot.slane %v941, 2
        %v958 = vsel %vm584, %v956, %v957
        %v959 = vrot.slane %v942, 2
        %v960 = vrot.slane %v943, 2
        %v961 = vsel %vm584, %v959, %v960
        %v962 = vrot.slane %v944, 2
        %v963 = vrot.slane %v945, 2
        %v964 = vsel %vm584, %v962, %v963
        %v965 = vrot.slane %v946, 2
        %v966 = vrot.slane %v947, 2
        %v967 = vsel %vm584, %v965, %v966
        %v976 = vadd.f32 %v931, %v956
        %v977 = vadd.f32 %v932, %v958
        %v978 = vadd.f32 %v933, %v959
        %v979 = vadd.f32 %v934, %v961
        %v980 = vadd.f32 %v935, %v962
        %v981 = vadd.f32 %v936, %v964
        %v982 = vadd.f32 %v937, %v965
        %v983 = vadd.f32 %v938, %v967
        %s984 = smul.u32 %s380, 192
        %s985 = scalar_lea.vmem [#allocation2], %s984
        %v986 = vld [vmem:[%s985] sm:$0xff]
        %v987 = vld [vmem:[%s985 + $0x8] sm:$0xff]
        %v988 = vld [vmem:[%s985 + $0x10] sm:$0x1]
        %v989 = vld [vmem:[%s985 + $0x18] sm:$0xff]
        %v990 = vld [vmem:[%s985 + $0x20] sm:$0xff]
        %v991 = vld [vmem:[%s985 + $0x28] sm:$0x1]
        %v992 = vld [vmem:[%s985 + $0x30] sm:$0xff]
        %v993 = vld [vmem:[%s985 + $0x38] sm:$0xff]
        %v994 = vld [vmem:[%s985 + $0x40] sm:$0x1]
        %v995 = vld [vmem:[%s985 + $0x48] sm:$0xff]
        %v996 = vld [vmem:[%s985 + $0x50] sm:$0xff]
        %v997 = vld [vmem:[%s985 + $0x58] sm:$0x1]
        %v998 = vld [vmem:[%s985 + $0x60] sm:$0xff]
        %v999 = vld [vmem:[%s985 + $0x68] sm:$0xff]
        %v1000 = vld [vmem:[%s985 + $0x70] sm:$0x1]
        %v1001 = vld [vmem:[%s985 + $0x78] sm:$0xff]
        %v1002 = vld [vmem:[%s985 + $0x80] sm:$0xff]
        %v1003 = vld [vmem:[%s985 + $0x88] sm:$0x1]
        %v1004 = vperm.slane %v411, 0
        %v1005 = vmul.f32 %v986, %v1004
        %v1006 = vmul.f32 %v987, %v1004
        %v1007 = vmul.f32 %v989, %v1004
        %v1008 = vmul.f32 %v990, %v1004
        %v1009 = vmul.f32 %v992, %v1004
        %v1010 = vmul.f32 %v993, %v1004
        %v1011 = vmul.f32 %v995, %v1004
        %v1012 = vmul.f32 %v996, %v1004
        %v1013 = vadd.f32 %v976, %v1005
        %v1014 = vadd.f32 %v977, %v1006
        %v1015 = vadd.f32 %v978, %v1007
        %v1016 = vadd.f32 %v979, %v1008
        %v1017 = vadd.f32 %v980, %v1009
        %v1018 = vadd.f32 %v981, %v1010
        %v1019 = vadd.f32 %v982, %v1011
        %v1020 = vadd.f32 %v983, %v1012
        %v1021 = vperm.slane %v417, 0
        %v1022 = vmul.f32 %v989, %v1021
        %v1023 = vmul.f32 %v990, %v1021
        %v1024 = vmul.f32 %v992, %v1021
        %v1025 = vmul.f32 %v993, %v1021
        %v1026 = vmul.f32 %v995, %v1021
        %v1027 = vmul.f32 %v996, %v1021
        %v1028 = vmul.f32 %v998, %v1021
        %v1029 = vmul.f32 %v999, %v1021
        %v1030 = vadd.f32 %v1013, %v1022
        %v1031 = vadd.f32 %v1014, %v1023
        %v1032 = vadd.f32 %v1015, %v1024
        %v1033 = vadd.f32 %v1016, %v1025
        %v1034 = vadd.f32 %v1017, %v1026
        %v1035 = vadd.f32 %v1018, %v1027
        %v1036 = vadd.f32 %v1019, %v1028
        %v1037 = vadd.f32 %v1020, %v1029
        %v1038 = vperm.slane %v423, 0
        %v1039 = vmul.f32 %v992, %v1038
        %v1040 = vmul.f32 %v993, %v1038
        %v1041 = vmul.f32 %v995, %v1038
        %v1042 = vmul.f32 %v996, %v1038
        %v1043 = vmul.f32 %v998, %v1038
        %v1044 = vmul.f32 %v999, %v1038
        %v1045 = vmul.f32 %v1001, %v1038
        %v1046 = vmul.f32 %v1002, %v1038
        %v1047 = vadd.f32 %v1030, %v1039
        %v1048 = vadd.f32 %v1031, %v1040
        %v1049 = vadd.f32 %v1032, %v1041
        %v1050 = vadd.f32 %v1033, %v1042
        %v1051 = vadd.f32 %v1034, %v1043
        %v1052 = vadd.f32 %v1035, %v1044
        %v1053 = vadd.f32 %v1036, %v1045
        %v1054 = vadd.f32 %v1037, %v1046
        %v1055 = vperm.slane %v413, 0
        %v1056 = vmul.f32 %v987, %v1055
        %v1057 = vmul.f32 %v990, %v1055
        %v1058 = vmul.f32 %v993, %v1055
        %v1059 = vmul.f32 %v996, %v1055
        %v1064 = vrot.slane %v1056, 1
        %v1065 = vrot.slane %v1057, 1
        %v1066 = vrot.slane %v1058, 1
        %v1067 = vrot.slane %v1059, 1
        %v1072 = vadd.f32 %v1047, %v1064
        %v1073 = vadd.f32 %v1048, %v1064
        %v1074 = vadd.f32 %v1049, %v1065
        %v1075 = vadd.f32 %v1050, %v1065
        %v1076 = vadd.f32 %v1051, %v1066
        %v1077 = vadd.f32 %v1052, %v1066
        %v1078 = vadd.f32 %v1053, %v1067
        %v1079 = vadd.f32 %v1054, %v1067
        %v1080 = vperm.slane %v419, 0
        %v1081 = vmul.f32 %v990, %v1080
        %v1082 = vmul.f32 %v993, %v1080
        %v1083 = vmul.f32 %v996, %v1080
        %v1084 = vmul.f32 %v999, %v1080
        %v1089 = vrot.slane %v1081, 1
        %v1090 = vrot.slane %v1082, 1
        %v1091 = vrot.slane %v1083, 1
        %v1092 = vrot.slane %v1084, 1
        %v1097 = vadd.f32 %v1072, %v1089
        %v1098 = vadd.f32 %v1073, %v1089
        %v1099 = vadd.f32 %v1074, %v1090
        %v1100 = vadd.f32 %v1075, %v1090
        %v1101 = vadd.f32 %v1076, %v1091
        %v1102 = vadd.f32 %v1077, %v1091
        %v1103 = vadd.f32 %v1078, %v1092
        %v1104 = vadd.f32 %v1079, %v1092
        %v1105 = vperm.slane %v425, 0
        %v1106 = vmul.f32 %v993, %v1105
        %v1107 = vmul.f32 %v996, %v1105
        %v1108 = vmul.f32 %v999, %v1105
        %v1109 = vmul.f32 %v1002, %v1105
        %v1114 = vrot.slane %v1106, 1
        %v1115 = vrot.slane %v1107, 1
        %v1116 = vrot.slane %v1108, 1
        %v1117 = vrot.slane %v1109, 1
        %v1122 = vadd.f32 %v1097, %v1114
        %v1123 = vadd.f32 %v1098, %v1114
        %v1124 = vadd.f32 %v1099, %v1115
        %v1125 = vadd.f32 %v1100, %v1115
        %v1126 = vadd.f32 %v1101, %v1116
        %v1127 = vadd.f32 %v1102, %v1116
        %v1128 = vadd.f32 %v1103, %v1117
        %v1129 = vadd.f32 %v1104, %v1117
        %v1130 = vperm.slane %v415, 0
        %v1131 = vmul.f32 %v987, %v1130
        %v1132 = vmul.f32 %v988, %v1130
        %v1133 = vmul.f32 %v990, %v1130
        %v1134 = vmul.f32 %v991, %v1130
        %v1135 = vmul.f32 %v993, %v1130
        %v1136 = vmul.f32 %v994, %v1130
        %v1137 = vmul.f32 %v996, %v1130
        %v1138 = vmul.f32 %v997, %v1130
        %v1147 = vrot.slane %v1131, 2
        %v1148 = vrot.slane %v1132, 2
        %v1149 = vsel %vm584, %v1147, %v1148
        %v1150 = vrot.slane %v1133, 2
        %v1151 = vrot.slane %v1134, 2
        %v1152 = vsel %vm584, %v1150, %v1151
        %v1153 = vrot.slane %v1135, 2
        %v1154 = vrot.slane %v1136, 2
        %v1155 = vsel %vm584, %v1153, %v1154
        %v1156 = vrot.slane %v1137, 2
        %v1157 = vrot.slane %v1138, 2
        %v1158 = vsel %vm584, %v1156, %v1157
        %v1167 = vadd.f32 %v1122, %v1147
        %v1168 = vadd.f32 %v1123, %v1149
        %v1169 = vadd.f32 %v1124, %v1150
        %v1170 = vadd.f32 %v1125, %v1152
        %v1171 = vadd.f32 %v1126, %v1153
        %v1172 = vadd.f32 %v1127, %v1155
        %v1173 = vadd.f32 %v1128, %v1156
        %v1174 = vadd.f32 %v1129, %v1158
        %v1175 = vperm.slane %v421, 0
        %v1176 = vmul.f32 %v990, %v1175
        %v1177 = vmul.f32 %v991, %v1175
        %v1178 = vmul.f32 %v993, %v1175
        %v1179 = vmul.f32 %v994, %v1175
        %v1180 = vmul.f32 %v996, %v1175
        %v1181 = vmul.f32 %v997, %v1175
        %v1182 = vmul.f32 %v999, %v1175
        %v1183 = vmul.f32 %v1000, %v1175
        %v1192 = vrot.slane %v1176, 2
        %v1193 = vrot.slane %v1177, 2
        %v1194 = vsel %vm584, %v1192, %v1193
        %v1195 = vrot.slane %v1178, 2
        %v1196 = vrot.slane %v1179, 2
        %v1197 = vsel %vm584, %v1195, %v1196
        %v1198 = vrot.slane %v1180, 2
        %v1199 = vrot.slane %v1181, 2
        %v1200 = vsel %vm584, %v1198, %v1199
        %v1201 = vrot.slane %v1182, 2
        %v1202 = vrot.slane %v1183, 2
        %v1203 = vsel %vm584, %v1201, %v1202
        %v1212 = vadd.f32 %v1167, %v1192
        %v1213 = vadd.f32 %v1168, %v1194
        %v1214 = vadd.f32 %v1169, %v1195
        %v1215 = vadd.f32 %v1170, %v1197
        %v1216 = vadd.f32 %v1171, %v1198
        %v1217 = vadd.f32 %v1172, %v1200
        %v1218 = vadd.f32 %v1173, %v1201
        %v1219 = vadd.f32 %v1174, %v1203
        %v1220 = vperm.slane %v427, 0
        %v1221 = vmul.f32 %v993, %v1220
        %v1222 = vmul.f32 %v994, %v1220
        %v1223 = vmul.f32 %v996, %v1220
        %v1224 = vmul.f32 %v997, %v1220
        %v1225 = vmul.f32 %v999, %v1220
        %v1226 = vmul.f32 %v1000, %v1220
        %v1227 = vmul.f32 %v1002, %v1220
        %v1228 = vmul.f32 %v1003, %v1220
        %v1237 = vrot.slane %v1221, 2
        %v1238 = vrot.slane %v1222, 2
        %v1239 = vsel %vm584, %v1237, %v1238
        %v1240 = vrot.slane %v1223, 2
        %v1241 = vrot.slane %v1224, 2
        %v1242 = vsel %vm584, %v1240, %v1241
        %v1243 = vrot.slane %v1225, 2
        %v1244 = vrot.slane %v1226, 2
        %v1245 = vsel %vm584, %v1243, %v1244
        %v1246 = vrot.slane %v1227, 2
        %v1247 = vrot.slane %v1228, 2
        %v1248 = vsel %vm584, %v1246, %v1247
        %v1257 = vadd.f32 %v1212, %v1237
        %v1258 = vadd.f32 %v1213, %v1239
        %v1259 = vadd.f32 %v1214, %v1240
        %v1260 = vadd.f32 %v1215, %v1242
        %v1261 = vadd.f32 %v1216, %v1243
        %v1262 = vadd.f32 %v1217, %v1245
        %v1263 = vadd.f32 %v1218, %v1246
        %v1264 = vadd.f32 %v1219, %v1248
        %v1266 = vperm.slane %v428, 0
        %v1268 = vadd.f32 %v1257, %v1266
        %v1269 = vadd.f32 %v1258, %v1266
        %v1270 = vadd.f32 %v1259, %v1266
        %v1271 = vadd.f32 %v1260, %v1266
        %v1272 = vadd.f32 %v1261, %v1266
        %v1273 = vadd.f32 %v1262, %v1266
        %v1274 = vadd.f32 %v1263, %v1266
        %v1275 = vadd.f32 %v1264, %v1266
        %1276 = vst [vmem:[%s153 - $0x7] sm:$0x80] %v1268
        %1277 = vst [vmem:[%s153 + $0x1] sm:$0x7f] %v1269
        %1278 = vst [vmem:[%s153 + $0x1] sm:$0x80] %v1270
        %1279 = vst [vmem:[%s153 + $0x9] sm:$0x7f] %v1271
        %1280 = vst [vmem:[%s153 + $0x9] sm:$0x80] %v1272
        %1281 = vst [vmem:[%s153 + $0x11] sm:$0x7f] %v1273
        %1282 = vst [vmem:[%s153 + $0x11] sm:$0x80] %v1274
        %1283 = vst [vmem:[%s153 + $0x19] sm:$0x7f] %v1275
        %s1284 = sadd.s32 96, %s429
        %s1285 = scalar_lea.vmem [#allocation2], %s1284
        %v1286 = vld [vmem:[%s1285] sm:$0xff]
        %v1287 = vld [vmem:[%s1285 + $0x8] sm:$0xff]
        %v1288 = vld [vmem:[%s1285 + $0x10] sm:$0x1]
        %v1289 = vld [vmem:[%s1285 + $0x18] sm:$0xff]
        %v1290 = vld [vmem:[%s1285 + $0x20] sm:$0xff]
        %v1291 = vld [vmem:[%s1285 + $0x28] sm:$0x1]
        %v1292 = vld [vmem:[%s1285 + $0x30] sm:$0xff]
        %v1293 = vld [vmem:[%s1285 + $0x38] sm:$0xff]
        %v1294 = vld [vmem:[%s1285 + $0x40] sm:$0x1]
        %v1295 = vld [vmem:[%s1285 + $0x48] sm:$0xff]
        %v1296 = vld [vmem:[%s1285 + $0x50] sm:$0xff]
        %v1297 = vld [vmem:[%s1285 + $0x58] sm:$0x1]
        %v1298 = vmul.f32 %v1286, %v449
        %v1299 = vmul.f32 %v1287, %v449
        %v1300 = vmul.f32 %v1289, %v449
        %v1301 = vmul.f32 %v1290, %v449
        %v1302 = vmul.f32 %v1289, %v458
        %v1303 = vmul.f32 %v1290, %v458
        %v1304 = vmul.f32 %v1292, %v458
        %v1305 = vmul.f32 %v1293, %v458
        %v1306 = vadd.f32 %v1298, %v1302
        %v1307 = vadd.f32 %v1299, %v1303
        %v1308 = vadd.f32 %v1300, %v1304
        %v1309 = vadd.f32 %v1301, %v1305
        %v1310 = vmul.f32 %v1292, %v475
        %v1311 = vmul.f32 %v1293, %v475
        %v1312 = vmul.f32 %v1295, %v475
        %v1313 = vmul.f32 %v1296, %v475
        %v1314 = vadd.f32 %v1306, %v1310
        %v1315 = vadd.f32 %v1307, %v1311
        %v1316 = vadd.f32 %v1308, %v1312
        %v1317 = vadd.f32 %v1309, %v1313
        %v1318 = vmul.f32 %v1287, %v492
        %v1319 = vmul.f32 %v1290, %v492
        %v1322 = vrot.slane %v1318, 1
        %v1323 = vrot.slane %v1319, 1
        %v1326 = vadd.f32 %v1314, %v1322
        %v1327 = vadd.f32 %v1315, %v1322
        %v1328 = vadd.f32 %v1316, %v1323
        %v1329 = vadd.f32 %v1317, %v1323
        %v1330 = vmul.f32 %v1290, %v517
        %v1331 = vmul.f32 %v1293, %v517
        %v1334 = vrot.slane %v1330, 1
        %v1335 = vrot.slane %v1331, 1
        %v1338 = vadd.f32 %v1326, %v1334
        %v1339 = vadd.f32 %v1327, %v1334
        %v1340 = vadd.f32 %v1328, %v1335
        %v1341 = vadd.f32 %v1329, %v1335
        %v1342 = vmul.f32 %v1293, %v542
        %v1343 = vmul.f32 %v1296, %v542
        %v1346 = vrot.slane %v1342, 1
        %v1347 = vrot.slane %v1343, 1
        %v1350 = vadd.f32 %v1338, %v1346
        %v1351 = vadd.f32 %v1339, %v1346
        %v1352 = vadd.f32 %v1340, %v1347
        %v1353 = vadd.f32 %v1341, %v1347
        %v1354 = vmul.f32 %v1287, %v567
        %v1355 = vmul.f32 %v1288, %v567
        %v1356 = vmul.f32 %v1290, %v567
        %v1357 = vmul.f32 %v1291, %v567
        %v1362 = vrot.slane %v1354, 2
        %v1363 = vrot.slane %v1355, 2
        %v1364 = vsel %vm584, %v1362, %v1363
        %v1365 = vrot.slane %v1356, 2
        %v1366 = vrot.slane %v1357, 2
        %v1367 = vsel %vm584, %v1365, %v1366
        %v1372 = vadd.f32 %v1350, %v1362
        %v1373 = vadd.f32 %v1351, %v1364
        %v1374 = vadd.f32 %v1352, %v1365
        %v1375 = vadd.f32 %v1353, %v1367
        %v1376 = vmul.f32 %v1290, %v613
        %v1377 = vmul.f32 %v1291, %v613
        %v1378 = vmul.f32 %v1293, %v613
        %v1379 = vmul.f32 %v1294, %v613
        %v1384 = vrot.slane %v1376, 2
        %v1385 = vrot.slane %v1377, 2
        %v1386 = vsel %vm584, %v1384, %v1385
        %v1387 = vrot.slane %v1378, 2
        %v1388 = vrot.slane %v1379, 2
        %v1389 = vsel %vm584, %v1387, %v1388
        %v1394 = vadd.f32 %v1372, %v1384
        %v1395 = vadd.f32 %v1373, %v1386
        %v1396 = vadd.f32 %v1374, %v1387
        %v1397 = vadd.f32 %v1375, %v1389
        %v1398 = vmul.f32 %v1293, %v658
        %v1399 = vmul.f32 %v1294, %v658
        %v1400 = vmul.f32 %v1296, %v658
        %v1401 = vmul.f32 %v1297, %v658
        %v1406 = vrot.slane %v1398, 2
        %v1407 = vrot.slane %v1399, 2
        %v1408 = vsel %vm584, %v1406, %v1407
        %v1409 = vrot.slane %v1400, 2
        %v1410 = vrot.slane %v1401, 2
        %v1411 = vsel %vm584, %v1409, %v1410
        %v1416 = vadd.f32 %v1394, %v1406
        %v1417 = vadd.f32 %v1395, %v1408
        %v1418 = vadd.f32 %v1396, %v1409
        %v1419 = vadd.f32 %v1397, %v1411
        %s1420 = sadd.s32 96, %s703
        %s1421 = scalar_lea.vmem [#allocation2], %s1420
        %v1422 = vld [vmem:[%s1421] sm:$0xff]
        %v1423 = vld [vmem:[%s1421 + $0x8] sm:$0xff]
        %v1424 = vld [vmem:[%s1421 + $0x10] sm:$0x1]
        %v1425 = vld [vmem:[%s1421 + $0x18] sm:$0xff]
        %v1426 = vld [vmem:[%s1421 + $0x20] sm:$0xff]
        %v1427 = vld [vmem:[%s1421 + $0x28] sm:$0x1]
        %v1428 = vld [vmem:[%s1421 + $0x30] sm:$0xff]
        %v1429 = vld [vmem:[%s1421 + $0x38] sm:$0xff]
        %v1430 = vld [vmem:[%s1421 + $0x40] sm:$0x1]
        %v1431 = vld [vmem:[%s1421 + $0x48] sm:$0xff]
        %v1432 = vld [vmem:[%s1421 + $0x50] sm:$0xff]
        %v1433 = vld [vmem:[%s1421 + $0x58] sm:$0x1]
        %v1434 = vmul.f32 %v1422, %v723
        %v1435 = vmul.f32 %v1423, %v723
        %v1436 = vmul.f32 %v1425, %v723
        %v1437 = vmul.f32 %v1426, %v723
        %v1438 = vadd.f32 %v1416, %v1434
        %v1439 = vadd.f32 %v1417, %v1435
        %v1440 = vadd.f32 %v1418, %v1436
        %v1441 = vadd.f32 %v1419, %v1437
        %v1442 = vmul.f32 %v1425, %v740
        %v1443 = vmul.f32 %v1426, %v740
        %v1444 = vmul.f32 %v1428, %v740
        %v1445 = vmul.f32 %v1429, %v740
        %v1446 = vadd.f32 %v1438, %v1442
        %v1447 = vadd.f32 %v1439, %v1443
        %v1448 = vadd.f32 %v1440, %v1444
        %v1449 = vadd.f32 %v1441, %v1445
        %v1450 = vmul.f32 %v1428, %v757
        %v1451 = vmul.f32 %v1429, %v757
        %v1452 = vmul.f32 %v1431, %v757
        %v1453 = vmul.f32 %v1432, %v757
        %v1454 = vadd.f32 %v1446, %v1450
        %v1455 = vadd.f32 %v1447, %v1451
        %v1456 = vadd.f32 %v1448, %v1452
        %v1457 = vadd.f32 %v1449, %v1453
        %v1458 = vmul.f32 %v1423, %v774
        %v1459 = vmul.f32 %v1426, %v774
        %v1462 = vrot.slane %v1458, 1
        %v1463 = vrot.slane %v1459, 1
        %v1466 = vadd.f32 %v1454, %v1462
        %v1467 = vadd.f32 %v1455, %v1462
        %v1468 = vadd.f32 %v1456, %v1463
        %v1469 = vadd.f32 %v1457, %v1463
        %v1470 = vmul.f32 %v1426, %v799
        %v1471 = vmul.f32 %v1429, %v799
        %v1474 = vrot.slane %v1470, 1
        %v1475 = vrot.slane %v1471, 1
        %v1478 = vadd.f32 %v1466, %v1474
        %v1479 = vadd.f32 %v1467, %v1474
        %v1480 = vadd.f32 %v1468, %v1475
        %v1481 = vadd.f32 %v1469, %v1475
        %v1482 = vmul.f32 %v1429, %v824
        %v1483 = vmul.f32 %v1432, %v824
        %v1486 = vrot.slane %v1482, 1
        %v1487 = vrot.slane %v1483, 1
        %v1490 = vadd.f32 %v1478, %v1486
        %v1491 = vadd.f32 %v1479, %v1486
        %v1492 = vadd.f32 %v1480, %v1487
        %v1493 = vadd.f32 %v1481, %v1487
        %v1494 = vmul.f32 %v1423, %v849
        %v1495 = vmul.f32 %v1424, %v849
        %v1496 = vmul.f32 %v1426, %v849
        %v1497 = vmul.f32 %v1427, %v849
        %v1502 = vrot.slane %v1494, 2
        %v1503 = vrot.slane %v1495, 2
        %v1504 = vsel %vm584, %v1502, %v1503
        %v1505 = vrot.slane %v1496, 2
        %v1506 = vrot.slane %v1497, 2
        %v1507 = vsel %vm584, %v1505, %v1506
        %v1512 = vadd.f32 %v1490, %v1502
        %v1513 = vadd.f32 %v1491, %v1504
        %v1514 = vadd.f32 %v1492, %v1505
        %v1515 = vadd.f32 %v1493, %v1507
        %v1516 = vmul.f32 %v1426, %v894
        %v1517 = vmul.f32 %v1427, %v894
        %v1518 = vmul.f32 %v1429, %v894
        %v1519 = vmul.f32 %v1430, %v894
        %v1524 = vrot.slane %v1516, 2
        %v1525 = vrot.slane %v1517, 2
        %v1526 = vsel %vm584, %v1524, %v1525
        %v1527 = vrot.slane %v1518, 2
        %v1528 = vrot.slane %v1519, 2
        %v1529 = vsel %vm584, %v1527, %v1528
        %v1534 = vadd.f32 %v1512, %v1524
        %v1535 = vadd.f32 %v1513, %v1526
        %v1536 = vadd.f32 %v1514, %v1527
        %v1537 = vadd.f32 %v1515, %v1529
        %v1538 = vmul.f32 %v1429, %v939
        %v1539 = vmul.f32 %v1430, %v939
        %v1540 = vmul.f32 %v1432, %v939
        %v1541 = vmul.f32 %v1433, %v939
        %v1546 = vrot.slane %v1538, 2
        %v1547 = vrot.slane %v1539, 2
        %v1548 = vsel %vm584, %v1546, %v1547
        %v1549 = vrot.slane %v1540, 2
        %v1550 = vrot.slane %v1541, 2
        %v1551 = vsel %vm584, %v1549, %v1550
        %v1556 = vadd.f32 %v1534, %v1546
        %v1557 = vadd.f32 %v1535, %v1548
        %v1558 = vadd.f32 %v1536, %v1549
        %v1559 = vadd.f32 %v1537, %v1551
        %s1560 = sadd.s32 96, %s984
        %s1561 = scalar_lea.vmem [#allocation2], %s1560
        %v1562 = vld [vmem:[%s1561] sm:$0xff]
        %v1563 = vld [vmem:[%s1561 + $0x8] sm:$0xff]
        %v1564 = vld [vmem:[%s1561 + $0x10] sm:$0x1]
        %v1565 = vld [vmem:[%s1561 + $0x18] sm:$0xff]
        %v1566 = vld [vmem:[%s1561 + $0x20] sm:$0xff]
        %v1567 = vld [vmem:[%s1561 + $0x28] sm:$0x1]
        %v1568 = vld [vmem:[%s1561 + $0x30] sm:$0xff]
        %v1569 = vld [vmem:[%s1561 + $0x38] sm:$0xff]
        %v1570 = vld [vmem:[%s1561 + $0x40] sm:$0x1]
        %v1571 = vld [vmem:[%s1561 + $0x48] sm:$0xff]
        %v1572 = vld [vmem:[%s1561 + $0x50] sm:$0xff]
        %v1573 = vld [vmem:[%s1561 + $0x58] sm:$0x1]
        %v1574 = vmul.f32 %v1562, %v1004
        %v1575 = vmul.f32 %v1563, %v1004
        %v1576 = vmul.f32 %v1565, %v1004
        %v1577 = vmul.f32 %v1566, %v1004
        %v1578 = vadd.f32 %v1556, %v1574
        %v1579 = vadd.f32 %v1557, %v1575
        %v1580 = vadd.f32 %v1558, %v1576
        %v1581 = vadd.f32 %v1559, %v1577
        %v1582 = vmul.f32 %v1565, %v1021
        %v1583 = vmul.f32 %v1566, %v1021
        %v1584 = vmul.f32 %v1568, %v1021
        %v1585 = vmul.f32 %v1569, %v1021
        %v1586 = vadd.f32 %v1578, %v1582
        %v1587 = vadd.f32 %v1579, %v1583
        %v1588 = vadd.f32 %v1580, %v1584
        %v1589 = vadd.f32 %v1581, %v1585
        %v1590 = vmul.f32 %v1568, %v1038
        %v1591 = vmul.f32 %v1569, %v1038
        %v1592 = vmul.f32 %v1571, %v1038
        %v1593 = vmul.f32 %v1572, %v1038
        %v1594 = vadd.f32 %v1586, %v1590
        %v1595 = vadd.f32 %v1587, %v1591
        %v1596 = vadd.f32 %v1588, %v1592
        %v1597 = vadd.f32 %v1589, %v1593
        %v1598 = vmul.f32 %v1563, %v1055
        %v1599 = vmul.f32 %v1566, %v1055
        %v1602 = vrot.slane %v1598, 1
        %v1603 = vrot.slane %v1599, 1
        %v1606 = vadd.f32 %v1594, %v1602
        %v1607 = vadd.f32 %v1595, %v1602
        %v1608 = vadd.f32 %v1596, %v1603
        %v1609 = vadd.f32 %v1597, %v1603
        %v1610 = vmul.f32 %v1566, %v1080
        %v1611 = vmul.f32 %v1569, %v1080
        %v1614 = vrot.slane %v1610, 1
        %v1615 = vrot.slane %v1611, 1
        %v1618 = vadd.f32 %v1606, %v1614
        %v1619 = vadd.f32 %v1607, %v1614
        %v1620 = vadd.f32 %v1608, %v1615
        %v1621 = vadd.f32 %v1609, %v1615
        %v1622 = vmul.f32 %v1569, %v1105
        %v1623 = vmul.f32 %v1572, %v1105
        %v1626 = vrot.slane %v1622, 1
        %v1627 = vrot.slane %v1623, 1
        %v1630 = vadd.f32 %v1618, %v1626
        %v1631 = vadd.f32 %v1619, %v1626
        %v1632 = vadd.f32 %v1620, %v1627
        %v1633 = vadd.f32 %v1621, %v1627
        %v1634 = vmul.f32 %v1563, %v1130
        %v1635 = vmul.f32 %v1564, %v1130
        %v1636 = vmul.f32 %v1566, %v1130
        %v1637 = vmul.f32 %v1567, %v1130
        %v1642 = vrot.slane %v1634, 2
        %v1643 = vrot.slane %v1635, 2
        %v1644 = vsel %vm584, %v1642, %v1643
        %v1645 = vrot.slane %v1636, 2
        %v1646 = vrot.slane %v1637, 2
        %v1647 = vsel %vm584, %v1645, %v1646
        %v1652 = vadd.f32 %v1630, %v1642
        %v1653 = vadd.f32 %v1631, %v1644
        %v1654 = vadd.f32 %v1632, %v1645
        %v1655 = vadd.f32 %v1633, %v1647
        %v1656 = vmul.f32 %v1566, %v1175
        %v1657 = vmul.f32 %v1567, %v1175
        %v1658 = vmul.f32 %v1569, %v1175
        %v1659 = vmul.f32 %v1570, %v1175
        %v1664 = vrot.slane %v1656, 2
        %v1665 = vrot.slane %v1657, 2
        %v1666 = vsel %vm584, %v1664, %v1665
        %v1667 = vrot.slane %v1658, 2
        %v1668 = vrot.slane %v1659, 2
        %v1669 = vsel %vm584, %v1667, %v1668
        %v1674 = vadd.f32 %v1652, %v1664
        %v1675 = vadd.f32 %v1653, %v1666
        %v1676 = vadd.f32 %v1654, %v1667
        %v1677 = vadd.f32 %v1655, %v1669
        %v1678 = vmul.f32 %v1569, %v1220
        %v1679 = vmul.f32 %v1570, %v1220
        %v1680 = vmul.f32 %v1572, %v1220
        %v1681 = vmul.f32 %v1573, %v1220
        %v1686 = vrot.slane %v1678, 2
        %v1687 = vrot.slane %v1679, 2
        %v1688 = vsel %vm584, %v1686, %v1687
        %v1689 = vrot.slane %v1680, 2
        %v1690 = vrot.slane %v1681, 2
        %v1691 = vsel %vm584, %v1689, %v1690
        %v1696 = vadd.f32 %v1674, %v1686
        %v1697 = vadd.f32 %v1675, %v1688
        %v1698 = vadd.f32 %v1676, %v1689
        %v1699 = vadd.f32 %v1677, %v1691
        %v1700 = vadd.f32 %v1696, %v1266
        %v1701 = vadd.f32 %v1697, %v1266
        %v1702 = vadd.f32 %v1698, %v1266
        %v1703 = vadd.f32 %v1699, %v1266
        %s1704 = scalar_lea.vmem %s153, 32 [#allocation7]
        %1705 = vst [vmem:[%s1704 - $0x7] sm:$0x80] %v1700
        %1706 = vst [vmem:[%s1704 + $0x1] sm:$0x7f] %v1701
        %1707 = vst [vmem:[%s1704 + $0x1] sm:$0x80] %v1702
        %1708 = vst [vmem:[%s1704 + $0x9] sm:$0x7f] %v1703
        %s1709 = sand.u32 %s82, 1
        %s1710 = scalar_lea.sflag [#allocation6], %s1709
        %s1711 = sand.u32 %s82, 1
        %s1712 = smul.addr %s1711, 48
        %s1713 = scalar_lea.vmem [#allocation7], %s1712
        // Predicated region
        $region45: #{tpu_custom_call.1} parent=27 // pred_check
          %p1714 = pneg %p92
        $region46: #{tpu_custom_call.1} parent=27 // pred_check_branch
          %1716 = sbr.rel (%p1714) target = $region48
        $region47: #{tpu_custom_call.1} parent=27 // pred_region
          %1718 = vsyncadd %s1710, 0
          %s1719 = smul.addr %s23, 6
          %s1720 = smul.addr %s22, 48
          %s1721 = sadd.s32 %s1719, %s1720
          %s1722 = smul.addr %s1721, 8
          %s1723 = scalar_lea.hbm %s3, %s1722
          %s1724 = sshll.u32 %s1713, 4
          %s1725 = int_to_ptr.vmem [resolvable:$true] %s1724
          %s1726 = sshll.u32 %s1723, 4
          %s1727 = int_to_ptr.hbm [resolvable:$true] %s1726
          %1732 = dma.vmem_to_hbm [thread:$0]  %s1725, 768, %s1727, %s1710, 128, 128, 8
        $region48: #{tpu_custom_call.1} parent=27 // pred_fallthru
          _
      $region28: #{tpu_custom_call.1} parent=5 // pred_fallthru
        _
      %p1733 = scmp.le.s32.totalorder 2, %s13
      // Predicated region
      $region49: #{tpu_custom_call.1} parent=5 // pred_check
        %p1734 = pneg %p1733
      $region50: #{tpu_custom_call.1} parent=5 // pred_check_branch
        %1736 = sbr.rel (%p1734) target = $region52
      $region51: #{tpu_custom_call.1} parent=5 // pred_region
        %s1737 = ssub.s32 %s13, 2
        // Predicated region
        $region53: #{tpu_custom_call.1} parent=51 // pred_check
          %p1738 = pneg %p98
        $region54: #{tpu_custom_call.1} parent=51 // pred_check_branch
          %1740 = sbr.rel (%p1738) target = $region56
        $region55: #{tpu_custom_call.1} parent=51 // pred_region
          %s1741 = sand.u32 %s83, 1
          %s1742 = scalar_lea.sflag [#allocation6], %s1741
          %s1743 = sand.u32 %s83, 1
          %s1744 = smul.addr %s1743, 48
          %s1745 = scalar_lea.vmem [#allocation7], %s1744
          %1747 = dma.done %s1742, 768
        $region56: #{tpu_custom_call.1} parent=51 // pred_fallthru
          _
      $region52: #{tpu_custom_call.1} parent=5 // pred_fallthru
        _
    $region6: #{tpu_custom_call.1} parent=1 // loop_footer
      %s17 = sadd.s32 1, %s13
    $region7: #{tpu_custom_call.1} parent=1 // loop_footer_branch
      %12 = sbr.rel target = $region3
    $region8: #{tpu_custom_call.1} parent=1 // loop_exit
      _
    %1748 = vsyncpa [#allocation5], 1
    %s1749 = scalar_lea.sflag [#allocation5], 1
    %1750 = vsyncpa %s1749, 1
    %1751 = vsyncpa [#allocation6], 1
    %s1752 = scalar_lea.sflag [#allocation6], 1
    %1753 = vsyncpa %s1752, 1
  %1754 = vsyncmov [#allocation3]
  %s1755 = vpop.sfrf %1754
  %p1756 = scmp.eq.s32.totalorder %s1755, 0
  %p1757 = pneg %p1756
  %1759 = shalt.err (%p1757)
  %s1760 = scalar_lea.sflag [#allocation3], 1
  %1761 = vsyncmov %s1760
  %s1762 = vpop.sfrf %1761
  %p1763 = scmp.eq.s32.totalorder %s1762, 0
  %p1764 = pneg %p1763
  %1766 = shalt.err (%p1764)
  %s1767 = scalar_lea.sflag [#allocation3], 2
  %1768 = vsyncmov %s1767
  %s1769 = vpop.sfrf %1768
  %p1770 = scmp.eq.s32.totalorder %s1769, 0
  %p1771 = pneg %p1770
  %1773 = shalt.err (%p1771)
  %s1774 = scalar_lea.sflag [#allocation3], 3
  %1775 = vsyncmov %s1774
  %s1776 = vpop.sfrf %1775
  %p1777 = scmp.eq.s32.totalorder %s1776, 0
  %p1778 = pneg %p1777
  %1780 = shalt.err (%p1778)

</llo_original>
